<compile_context>
chip_gen: v6e
topology: v6e:2x2x1
jax: 0.10.0
libtpu: 0.0.40
codegen_flags: <defaults>
</compile_context>

<pallas_src>
import functools
import numpy as np

import jax
import jax.numpy as jnp
from jax.experimental import pallas as pl
from jax.experimental.pallas import tpu as pltpu

KNN_NUM = 8
EF_DIM = 128
NEG_SLOPE = 0.01
ROW_TILE_CAP = 512   # rows per tile; KNN kernels push M = 8*512 rows per matmul


def _lrelu(x):
    # max(x, a*x) == leaky_relu for 0 < a < 1
    return jnp.maximum(x, NEG_SLOPE * x)


def _round_up(x, m):
    return (x + m - 1) // m * m


def _pick_rows(n, cap=ROW_TILE_CAP):
    """Row tile (multiple of 16 for bf16 sublane packing) + padded row count.

    Prefers >= 2 grid steps so dimension_semantics=("parallel",) can shard the
    grid across both v7x TensorCores."""
    if n >= 2 * cap:
        return cap, _round_up(n, cap)
    t = min(cap, _round_up(max((n + 1) // 2, 16), 16))
    return t, _round_up(n, t)


# ----------------------------------------------------------------------------
# Pallas kernels
# ----------------------------------------------------------------------------

def _pc_first_res_kernel(xyz_ref, w1_ref, b1_ref, w2_ref, b2_ref,
                         wr1_ref, br1_ref, wr2_ref, br2_ref, o_ref):
    # Fused: pc_conv_first -> leaky_relu -> pc_resnet_block.
    # xyz_ref: (KNN, TM, 3) bf16; weights bf16, biases f32 (1, C).
    K, T, _ = xyz_ref.shape
    C = o_ref.shape[-1]
    xyz = xyz_ref[...].astype(jnp.float32)                 # (K, T, 3)
    w1 = w1_ref[...].astype(jnp.float32)                   # (3, C)
    # K=3 contraction as 3 VPU broadcast MACs instead of a tiny MXU matmul.
    h3 = (xyz[:, :, 0:1] * w1[0:1, :] + xyz[:, :, 1:2] * w1[1:2, :]
          + xyz[:, :, 2:3] * w1[2:3, :] + b1_ref[...])     # (K, T, C) f32
    h = _lrelu(h3).astype(jnp.bfloat16).reshape(K * T, C)
    h = jnp.dot(h, w2_ref[...], preferred_element_type=jnp.float32) + b2_ref[...]
    y = _lrelu(jnp.max(h.reshape(K, T, C), axis=0))        # max over KNN, then lrelu
    r = _lrelu(jnp.dot(y.astype(jnp.bfloat16), wr1_ref[...],
                       preferred_element_type=jnp.float32) + br1_ref[...])
    r = jnp.dot(r.astype(jnp.bfloat16), wr2_ref[...],
                preferred_element_type=jnp.float32) + br2_ref[...]
    o_ref[...] = _lrelu(r + y).astype(o_ref.dtype)


def _pc_conv_res_kernel(feat_ref, xyz_ref, w1f_ref, w1x_ref, b1_ref, w2_ref, b2_ref,
                        wr1_ref, br1_ref, wr2_ref, br2_ref, o_ref):
    # Fused: pc_conv -> leaky_relu -> pc_resnet_block.
    # feat_ref: (KNN, TM, C) bf16, xyz_ref: (KNN, TM, 3) bf16.
    # cat([feat, xyz]) @ W1 == feat @ W1f (MXU) + xyz-broadcast-MACs (VPU).
    K, T, C = feat_ref.shape
    xyz = xyz_ref[...].astype(jnp.float32)
    w1x = w1x_ref[...].astype(jnp.float32)                 # (3, C)
    h3 = (xyz[:, :, 0:1] * w1x[0:1, :] + xyz[:, :, 1:2] * w1x[1:2, :]
          + xyz[:, :, 2:3] * w1x[2:3, :] + b1_ref[...])    # (K, T, C) f32
    feat = feat_ref[...].reshape(K * T, C)
    h = (jnp.dot(feat, w1f_ref[...], preferred_element_type=jnp.float32)
         + h3.reshape(K * T, C))
    h = _lrelu(h).astype(jnp.bfloat16)
    h = jnp.dot(h, w2_ref[...], preferred_element_type=jnp.float32) + b2_ref[...]
    y = _lrelu(jnp.max(h.reshape(K, T, C), axis=0))
    r = _lrelu(jnp.dot(y.astype(jnp.bfloat16), wr1_ref[...],
                       preferred_element_type=jnp.float32) + br1_ref[...])
    r = jnp.dot(r.astype(jnp.bfloat16), wr2_ref[...],
                preferred_element_type=jnp.float32) + br2_ref[...]
    o_ref[...] = _lrelu(r + y).astype(o_ref.dtype)


def _conv3d_plane_kernel(pm_ref, p0_ref, pp_ref, mask_ref, w_ref, b_ref, o_ref,
                         *, Zp, apply_act):
    # One padded x-plane of the 3x3x3 conv ("Option B"): inputs are the planes
    # x-1, x, x+1 flattened to (1, Yp*Zp, C); the nine (ky,kz) taps per plane are
    # shifted in-VMEM views of a halo-extended copy; (27,C,C) weight is resident.
    # Output keeps the padded layout with a zeroed padding ring so the next conv
    # layer consumes it directly.
    R = o_ref.shape[1]
    C = o_ref.shape[-1]
    H = Zp + 1                                             # max |row shift| of a tap
    x = pl.program_id(0)
    zeros = jnp.zeros((H, C), jnp.bfloat16)
    planes = []
    for ref in (pm_ref, p0_ref, pp_ref):
        planes.append(jnp.concatenate([zeros, ref[0], zeros], axis=0))   # (R+2H, C)
    acc = jnp.zeros((R, C), jnp.float32) + b_ref[...]
    k = 0
    for kx in range(3):
        for ky in range(3):
            for kz in range(3):
                off = (ky - 1) * Zp + (kz - 1) + H         # static offset in [0, 2H]
                acc += jnp.dot(planes[kx][off:off + R, :], w_ref[k],
                               preferred_element_type=jnp.float32)
                k += 1
    # zero the padding ring (y/z via mask, x via plane-index predicate)
    xv = jnp.logical_and(x >= 1, x < pl.num_programs(0) - 1).astype(jnp.float32)
    out = acc * mask_ref[...] * xv
    if apply_act:
        out = _lrelu(out)
    o_ref[0] = out.astype(o_ref.dtype)


def _tail_kernel(x_ref, w4_ref, b4_ref, w5_ref, b5_ref, wh_ref, bh_ref, o_ref):
    # Fused: conv_4 -> lrelu -> conv_5 -> lrelu -> packed heads.
    # Packed head: lanes 0:3 = out_bool logits, lanes 3:6 = out_float (one matmul,
    # one lane-dense f32 writeback); sigmoid + slicing happen in the wrapper.
    h = _lrelu(jnp.dot(x_ref[...], w4_ref[...],
                       preferred_element_type=jnp.float32) + b4_ref[...])
    h = _lrelu(jnp.dot(h.astype(jnp.bfloat16), w5_ref[...],
                       preferred_element_type=jnp.float32) + b5_ref[...])
    o_ref[...] = (jnp.dot(h.astype(jnp.bfloat16), wh_ref[...],
                          preferred_element_type=jnp.float32)
                  + bh_ref[...]).astype(o_ref.dtype)


# ----------------------------------------------------------------------------
# Wrappers (pallas_call plumbing)
# ----------------------------------------------------------------------------

_W_SPEC = pl.BlockSpec((EF_DIM, EF_DIM), lambda i: (0, 0))
_B_SPEC = pl.BlockSpec((1, EF_DIM), lambda i: (0, 0))
_W3_SPEC = pl.BlockSpec((3, EF_DIM), lambda i: (0, 0))
_PAR = pltpu.CompilerParams(dimension_semantics=("parallel",))


def pc_first_res_call(xyz_g, kp0, tm):
    K, Np, _ = xyz_g.shape
    return pl.pallas_call(
        _pc_first_res_kernel,
        out_shape=jax.ShapeDtypeStruct((Np, EF_DIM), jnp.bfloat16),
        grid=(Np // tm,),
        in_specs=[
            pl.BlockSpec((KNN_NUM, tm, 3), lambda i: (0, i, 0)),
            _W3_SPEC, _B_SPEC,          # w1, b1
            _W_SPEC, _B_SPEC,           # w2, b2
            _W_SPEC, _B_SPEC,           # wr1, br1
            _W_SPEC, _B_SPEC,           # wr2, br2
        ],
        out_specs=pl.BlockSpec((tm, EF_DIM), lambda i: (i, 0)),
        compiler_params=_PAR,
    )(xyz_g, *kp0)


def pc_conv_res_call(feat_g, xyz_g, kpi, tm):
    K, Np, C = feat_g.shape
    return pl.pallas_call(
        _pc_conv_res_kernel,
        out_shape=jax.ShapeDtypeStruct((Np, EF_DIM), jnp.bfloat16),
        grid=(Np // tm,),
        in_specs=[
            pl.BlockSpec((KNN_NUM, tm, EF_DIM), lambda i: (0, i, 0)),
            pl.BlockSpec((KNN_NUM, tm, 3), lambda i: (0, i, 0)),
            _W_SPEC,                    # w1f
            _W3_SPEC, _B_SPEC,          # w1x, b1
            _W_SPEC, _B_SPEC,           # w2, b2
            _W_SPEC, _B_SPEC,           # wr1, br1
            _W_SPEC, _B_SPEC,           # wr2, br2
        ],
        out_specs=pl.BlockSpec((tm, EF_DIM), lambda i: (i, 0)),
        compiler_params=_PAR,
    )(feat_g, xyz_g, *kpi)


def conv3d_call(g2, kpc, mask, Zp, act=True):
    # g2: (Xp, Yp*Zp, C) bf16 padded grid (zero border ring maintained between layers).
    w27, b = kpc
    Xp, R, C = g2.shape
    kern = functools.partial(_conv3d_plane_kernel, Zp=Zp, apply_act=act)
    return pl.pallas_call(
        kern,
        out_shape=jax.ShapeDtypeStruct((Xp, R, C), jnp.bfloat16),
        grid=(Xp,),
        in_specs=[
            pl.BlockSpec((1, R, C), lambda x: (jnp.maximum(x - 1, 0), 0, 0)),
            pl.BlockSpec((1, R, C), lambda x: (x, 0, 0)),
            pl.BlockSpec((1, R, C), lambda x: (jnp.minimum(x + 1, Xp - 1), 0, 0)),
            pl.BlockSpec((R, 1), lambda x: (0, 0)),
            pl.BlockSpec((27, C, C), lambda x: (0, 0, 0)),
            pl.BlockSpec((1, C), lambda x: (0, 0)),
        ],
        out_specs=pl.BlockSpec((1, R, C), lambda x: (x, 0, 0)),
        compiler_params=_PAR,
    )(g2, g2, g2, mask, w27, b)


def tail_call(x, kpt, n_out=3):
    N, _ = x.shape
    tm, Np = _pick_rows(N)
    if Np != N:
        x = jnp.pad(x, ((0, Np - N), (0, 0)))
    packed = pl.pallas_call(
        _tail_kernel,
        out_shape=jax.ShapeDtypeStruct((Np, EF_DIM), jnp.float32),
        grid=(Np // tm,),
        in_specs=[pl.BlockSpec((tm, EF_DIM), lambda i: (i, 0)),
                  _W_SPEC, _B_SPEC,     # conv_4
                  _W_SPEC, _B_SPEC,     # conv_5
                  _W_SPEC, _B_SPEC],    # packed heads
        out_specs=pl.BlockSpec((tm, EF_DIM), lambda i: (i, 0)),
        compiler_params=_PAR,
    )(x, *kpt)
    out_bool = jax.nn.sigmoid(packed[:N, 0:n_out])         # exact sigmoid (tiny op)
    out_float = packed[:N, n_out:2 * n_out]
    return out_bool, out_float


# ----------------------------------------------------------------------------
# Parameters (deterministic synthetic init) + kernel-ready preparation
# ----------------------------------------------------------------------------

def init_params(key):
    params = {}

    def split():
        nonlocal key
        key, sub = jax.random.split(key)
        return sub

    def lin(cin, cout):
        w = jax.random.normal(split(), (cin, cout), jnp.float32) / np.sqrt(cin)
        b = jax.random.normal(split(), (cout,), jnp.float32) * 0.05
        return w, b

    w1, b1 = lin(3, EF_DIM)
    w2, b2 = lin(EF_DIM, EF_DIM)
    params["pc_conv_0"] = (w1, b1, w2, b2)
    for i in range(1, 7):
        w1, b1 = lin(EF_DIM + 3, EF_DIM)
        w2, b2 = lin(EF_DIM, EF_DIM)
        params[f"pc_conv_{i}"] = (w1[:EF_DIM], w1[EF_DIM:], b1, w2, b2)
    for i in range(1, 8):
        w1, b1 = lin(EF_DIM, EF_DIM)
        w2, b2 = lin(EF_DIM, EF_DIM)
        params[f"pc_res_{i}"] = (w1, b1, w2, b2)
    for name in ("conv_1", "conv_2", "conv_3"):
        w = jax.random.normal(split(), (27, EF_DIM, EF_DIM), jnp.float32) / np.sqrt(27 * EF_DIM)
        b = jax.random.normal(split(), (EF_DIM,), jnp.float32) * 0.05
        params[name] = (w, b)
    params["conv_4"] = lin(EF_DIM, EF_DIM)
    params["conv_5"] = lin(EF_DIM, EF_DIM)
    params["out_bool"] = lin(EF_DIM, 3)
    params["out_float"] = lin(EF_DIM, 3)
    return params


def _prep_lin(w, b):
    return w.astype(jnp.bfloat16), b.reshape(1, -1).astype(jnp.float32)


def prepare_params(params):
    """bf16 weights (MXU fast path), f32 (1,C) biases, packed tail heads."""
    kp = {}
    w1, b1, w2, b2 = params["pc_conv_0"]
    wr1, br1, wr2, br2 = params["pc_res_1"]
    kp["pc0"] = (*_prep_lin(w1, b1), *_prep_lin(w2, b2),
                 *_prep_lin(wr1, br1), *_prep_lin(wr2, br2))
    for i in range(1, 7):
        w1f, w1x, b1, w2, b2 = params[f"pc_conv_{i}"]
        wr1, br1, wr2, br2 = params[f"pc_res_{i + 1}"]
        kp[f"pc{i}"] = (w1f.astype(jnp.bfloat16), w1x.astype(jnp.bfloat16),
                        b1.reshape(1, -1).astype(jnp.float32),
                        *_prep_lin(w2, b2), *_prep_lin(wr1, br1), *_prep_lin(wr2, br2))
    for name in ("conv_1", "conv_2", "conv_3"):
        w27, b = params[name]
        kp[name] = (w27.astype(jnp.bfloat16), b.reshape(1, -1).astype(jnp.float32))

    wb, bb = params["out_bool"]
    wf, bf = params["out_float"]
    wh = jnp.zeros((EF_DIM, EF_DIM), jnp.float32).at[:, 0:3].set(wb).at[:, 3:6].set(wf)
    bh = jnp.zeros((EF_DIM,), jnp.float32).at[0:3].set(bb).at[3:6].set(bf)
    kp["tail"] = (*_prep_lin(*params["conv_4"]), *_prep_lin(*params["conv_5"]),
                  wh.astype(jnp.bfloat16), bh.reshape(1, -1))
    return kp


# ----------------------------------------------------------------------------
# Forward pass (Pallas path).  out_bool=True, out_float=True.
# ----------------------------------------------------------------------------

def local_pointnet_forward(params, pc_KNN_idx, pc_KNN_xyz, voxel_xyz_int,
                           voxel_KNN_idx, voxel_KNN_xyz):
    kp = prepare_params(params)

    # Data-dependent grid extent comes from an *input*, so resolve it up front
    # (before any device compute) instead of syncing mid-graph.
    vint = np.asarray(jax.device_get(voxel_xyz_int))
    vmin = vint.min(0)
    size = vint.max(0) - vmin + 1
    vshift = jnp.asarray(vint - vmin[None, :], dtype=jnp.int32)

    N_pc = pc_KNN_xyz.shape[0] // KNN_NUM
    N_vox = voxel_KNN_xyz.shape[0] // KNN_NUM
    tm_pc, Np_pc = _pick_rows(N_pc)
    tm_vox, Np_vox = _pick_rows(N_vox)

    def group_xyz(xyz, N, Np):
        g = xyz.reshape(N, KNN_NUM, 3).transpose(1, 0, 2)   # neighbor-major (K, N, 3)
        if Np != N:
            g = jnp.pad(g, ((0, 0), (0, Np - N), (0, 0)))
        return g.astype(jnp.bfloat16)

    def group_idx(idx, N, Np):
        g = idx.reshape(N, KNN_NUM).T                       # neighbor-major (K, N)
        if Np != N:
            g = jnp.pad(g, ((0, 0), (0, Np - N)))           # pad rows gather row 0 (unused)
        return g

    pc_xyz_g = group_xyz(pc_KNN_xyz, N_pc, Np_pc)
    vox_xyz_g = group_xyz(voxel_KNN_xyz, N_vox, Np_vox)
    pc_idx_g = group_idx(pc_KNN_idx, N_pc, Np_pc)
    vox_idx_g = group_idx(voxel_KNN_idx, N_vox, Np_vox)

    out = pc_first_res_call(pc_xyz_g, kp["pc0"], tm_pc)      # (Np_pc, 128) bf16
    for i in range(1, 6):
        # TODO(synk): in-kernel KNN gather (VMEM-resident table / DMA gather) would
        # remove this 8x-expanded HBM materialization every layer.
        feat_g = out[pc_idx_g]                               # (KNN, Np_pc, 128) bf16
        out = pc_conv_res_call(feat_g, pc_xyz_g, kp[f"pc{i}"], tm_pc)
    feat_g = out[vox_idx_g]                                  # (KNN, Np_vox, 128) bf16
    out = pc_conv_res_call(feat_g, vox_xyz_g, kp["pc6"], tm_vox)
    out = out[:N_vox]

    # Dense voxel grid kept in a 1-voxel zero-padded layout for the conv chain.
    X, Y, Z = int(size[0]), int(size[1]), int(size[2])
    Xp, Yp, Zp = X + 2, Y + 2, Z + 2
    R = Yp * Zp
    # TODO(synk): torch advanced-index assignment with duplicate voxel coords is
    # nondeterministic; test data uses unique coordinates so .at[].set matches.
    grid = jnp.zeros((Xp, Yp, Zp, EF_DIM), jnp.bfloat16)
    grid = grid.at[vshift[:, 0] + 1, vshift[:, 1] + 1, vshift[:, 2] + 1].set(out)
    g2 = grid.reshape(Xp, R, EF_DIM)

    yy, zz = np.meshgrid(np.arange(Yp), np.arange(Zp), indexing="ij")
    yz_interior = ((yy >= 1) & (yy <= Yp - 2) & (zz >= 1) & (zz <= Zp - 2))
    mask = jnp.asarray(yz_interior.reshape(R, 1).astype(np.float32))

    g2 = conv3d_call(g2, kp["conv_1"], mask, Zp, act=True)
    g2 = conv3d_call(g2, kp["conv_2"], mask, Zp, act=True)
    # torch does conv_3 -> gather -> leaky_relu; elementwise lrelu commutes with
    # the gather so it is fused into the conv_3 kernel.
    g2 = conv3d_call(g2, kp["conv_3"], mask, Zp, act=True)

    g3d = g2.reshape(Xp, Yp, Zp, EF_DIM)
    feats = g3d[vshift[:, 0] + 1, vshift[:, 1] + 1, vshift[:, 2] + 1]   # (N_vox, 128) bf16

    out_bool, out_float = tail_call(feats, kp["tail"])
    return out_bool, out_float


# ----------------------------------------------------------------------------
# Pure-JAX f32 reference (direct transcription of the PyTorch forward)
# ----------------------------------------------------------------------------

def ref_forward(params, pc_KNN_idx, pc_KNN_xyz, voxel_xyz_int, voxel_KNN_idx,
                voxel_KNN_xyz):
    lrelu = lambda x: jnp.where(x > 0, x, NEG_SLOPE * x)

    def pc_conv_first_r(xyz, p):
        w1, b1, w2, b2 = p
        h = lrelu(xyz @ w1 + b1)
        h = h @ w2 + b2
        return jnp.max(h.reshape(-1, KNN_NUM, EF_DIM), axis=1)

    def pc_conv_r(x, idx, xyz, p):
        w1f, w1x, b1, w2, b2 = p
        inp = jnp.concatenate([x[idx], xyz], axis=1)
        w1 = jnp.concatenate([w1f, w1x], axis=0)
        h = lrelu(inp @ w1 + b1)
        h = h @ w2 + b2
        return jnp.max(h.reshape(-1, KNN_NUM, EF_DIM), axis=1)

    def res_r(x, p):
        w1, b1, w2, b2 = p
        h = lrelu(x @ w1 + b1)
        h = h @ w2 + b2
        return lrelu(h + x)

    def conv3d_r(g, p):
        w27, b = p
        X, Y, Z, C = g.shape
        gp = jnp.pad(g, ((1, 1), (1, 1), (1, 1), (0, 0)))
        acc = jnp.zeros((X, Y, Z, C), jnp.float32) + b
        k = 0
        for kx in range(3):
            for ky in range(3):
                for kz in range(3):
                    acc = acc + jnp.einsum(
                        'xyzc,cd->xyzd', gp[kx:kx + X, ky:ky + Y, kz:kz + Z, :], w27[k])
                    k += 1
        return acc

    out = lrelu(pc_conv_first_r(pc_KNN_xyz, params["pc_conv_0"]))
    out = res_r(out, params["pc_res_1"])
    for i in range(1, 6):
        out = lrelu(pc_conv_r(out, pc_KNN_idx, pc_KNN_xyz, params[f"pc_conv_{i}"]))
        out = res_r(out, params[f"pc_res_{i + 1}"])
    out = lrelu(pc_conv_r(out, voxel_KNN_idx, voxel_KNN_xyz, params["pc_conv_6"]))
    out = res_r(out, params["pc_res_7"])

    vint = np.asarray(jax.device_get(voxel_xyz_int))
    vmin = vint.min(0)
    size = vint.max(0) - vmin + 1
    vshift = jnp.asarray(vint - vmin[None, :], dtype=jnp.int32)
    grid = jnp.zeros((int(size[0]), int(size[1]), int(size[2]), EF_DIM), jnp.float32)
    grid = grid.at[vshift[:, 0], vshift[:, 1], vshift[:, 2]].set(out)

    g = lrelu(conv3d_r(grid, params["conv_1"]))
    g = lrelu(conv3d_r(g, params["conv_2"]))
    g = conv3d_r(g, params["conv_3"])
    out = g[vshift[:, 0], vshift[:, 1], vshift[:, 2]]
    out = lrelu(out)
    out = lrelu(out @ params["conv_4"][0] + params["conv_4"][1])
    out = lrelu(out @ params["conv_5"][0] + params["conv_5"][1])
    ob = jax.nn.sigmoid(out @ params["out_bool"][0] + params["out_bool"][1])
    of = out @ params["out_float"][0] + params["out_float"][1]
    return ob, of


# ----------------------------------------------------------------------------

if __name__ == "__main__":
    key = jax.random.PRNGKey(0)
    k_params, k1, k2, k3, k4 = jax.random.split(key, 5)

    N_pc = 32    # number of input points
    N_vox = 16   # number of voxels

    params = init_params(k_params)

    pc_KNN_idx = jax.random.randint(k1, (N_pc * KNN_NUM,), 0, N_pc, dtype=jnp.int32)
    pc_KNN_xyz = jax.random.uniform(k2, (N_pc * KNN_NUM, 3), jnp.float32, -1.0, 1.0)
    voxel_KNN_idx = jax.random.randint(k3, (N_vox * KNN_NUM,), 0, N_pc, dtype=jnp.int32)
    voxel_KNN_xyz = jax.random.uniform(k4, (N_vox * KNN_NUM, 3), jnp.float32, -1.0, 1.0)

    # unique integer voxel coordinates inside a 4x4x4 box (arbitrary offset)
    all_coords = np.array([[x, y, z] for x in range(4) for y in range(4) for z in range(4)],
                          dtype=np.int32)
    sel = np.random.RandomState(0).permutation(64)[:N_vox]
    voxel_xyz_int = jnp.asarray(all_coords[sel] + np.array([5, -2, 3], dtype=np.int32))

    out_bool, out_float = local_pointnet_forward(
        params, pc_KNN_idx, pc_KNN_xyz, voxel_xyz_int, voxel_KNN_idx, voxel_KNN_xyz)
    jax.block_until_ready((out_bool, out_float))

    ref_bool, ref_float = ref_forward(
        params, pc_KNN_idx, pc_KNN_xyz, voxel_xyz_int, voxel_KNN_idx, voxel_KNN_xyz)
    jax.block_until_ready((ref_bool, ref_float))

    # Pallas path runs bf16 inputs / f32 accumulation end-to-end, so tolerance is
    # loosened vs. an all-f32 path.
    # TODO(synk): add a bf16-weight reference with tighter tolerance to guard the
    # conv tap indexing / gather permutation against future restructurings.
    np.testing.assert_allclose(np.asarray(out_bool), np.asarray(ref_bool),
                               rtol=1e-1, atol=2e-1)
    np.testing.assert_allclose(np.asarray(out_float), np.asarray(ref_float),
                               rtol=1e-1, atol=2e-1)

    print("KERNEL_OK")
</pallas_src>

<mosaic_0001>
module attributes {stable_mosaic.version = 11 : i64} {
  func.func @_pc_first_res_kernel(%arg0: i32, %arg1: memref<8x16x3xbf16, #tpu.memory_space<vmem>>, %arg2: memref<3x128xbf16, #tpu.memory_space<vmem>>, %arg3: memref<1x128xf32, #tpu.memory_space<vmem>>, %arg4: memref<128x128xbf16, #tpu.memory_space<vmem>>, %arg5: memref<1x128xf32, #tpu.memory_space<vmem>>, %arg6: memref<128x128xbf16, #tpu.memory_space<vmem>>, %arg7: memref<1x128xf32, #tpu.memory_space<vmem>>, %arg8: memref<128x128xbf16, #tpu.memory_space<vmem>>, %arg9: memref<1x128xf32, #tpu.memory_space<vmem>>, %arg10: memref<16x128xbf16, #tpu.memory_space<vmem>>) attributes {dimension_semantics = [#tpu.dimension_semantics<parallel>], iteration_bounds = array<i64: 2>, scalar_prefetch = 0 : i64, scratch_operands = 0 : i64, tpu.core_type = #tpu.core_type<tc>, window_params = [{transform_indices = @transform_0, window_bounds = array<i64: 8, 16, 3>}, {pipeline_mode = #tpu.pipeline_mode<synchronous>, transform_indices = @transform_1, window_bounds = array<i64: 3, 128>}, {pipeline_mode = #tpu.pipeline_mode<synchronous>, transform_indices = @transform_2, window_bounds = array<i64: 1, 128>}, {pipeline_mode = #tpu.pipeline_mode<synchronous>, transform_indices = @transform_3, window_bounds = array<i64: 128, 128>}, {pipeline_mode = #tpu.pipeline_mode<synchronous>, transform_indices = @transform_4, window_bounds = array<i64: 1, 128>}, {pipeline_mode = #tpu.pipeline_mode<synchronous>, transform_indices = @transform_5, window_bounds = array<i64: 128, 128>}, {pipeline_mode = #tpu.pipeline_mode<synchronous>, transform_indices = @transform_6, window_bounds = array<i64: 1, 128>}, {pipeline_mode = #tpu.pipeline_mode<synchronous>, transform_indices = @transform_7, window_bounds = array<i64: 128, 128>}, {pipeline_mode = #tpu.pipeline_mode<synchronous>, transform_indices = @transform_8, window_bounds = array<i64: 1, 128>}, {transform_indices = @transform_9, window_bounds = array<i64: 16, 128>}]} {
    %c0 = arith.constant 0 : index
    %c0_0 = arith.constant 0 : index
    %c0_1 = arith.constant 0 : index
    %0 = vector.load %arg1[%c0, %c0_0, %c0_1] : memref<8x16x3xbf16, #tpu.memory_space<vmem>>, vector<8x16x3xbf16>
    %1 = arith.extf %0 : vector<8x16x3xbf16> to vector<8x16x3xf32>
    %c0_2 = arith.constant 0 : index
    %c0_3 = arith.constant 0 : index
    %2 = vector.load %arg2[%c0_2, %c0_3] : memref<3x128xbf16, #tpu.memory_space<vmem>>, vector<3x128xbf16>
    %3 = arith.extf %2 : vector<3x128xbf16> to vector<3x128xf32>
    %4 = vector.extract_strided_slice %1 {offsets = [0, 0, 0], sizes = [8, 16, 1], strides = [1, 1, 1]} : vector<8x16x3xf32> to vector<8x16x1xf32>
    %5 = vector.extract_strided_slice %3 {offsets = [0, 0], sizes = [1, 128], strides = [1, 1]} : vector<3x128xf32> to vector<1x128xf32>
    %6 = vector.shape_cast %5 : vector<1x128xf32> to vector<1x1x128xf32>
    %7 = vector.broadcast %4 : vector<8x16x1xf32> to vector<8x16x128xf32>
    %8 = vector.broadcast %6 : vector<1x1x128xf32> to vector<8x16x128xf32>
    %9 = arith.mulf %7, %8 : vector<8x16x128xf32>
    %10 = vector.extract_strided_slice %1 {offsets = [0, 0, 1], sizes = [8, 16, 1], strides = [1, 1, 1]} : vector<8x16x3xf32> to vector<8x16x1xf32>
    %11 = vector.extract_strided_slice %3 {offsets = [1, 0], sizes = [1, 128], strides = [1, 1]} : vector<3x128xf32> to vector<1x128xf32>
    %12 = vector.shape_cast %11 : vector<1x128xf32> to vector<1x1x128xf32>
    %13 = vector.broadcast %10 : vector<8x16x1xf32> to vector<8x16x128xf32>
    %14 = vector.broadcast %12 : vector<1x1x128xf32> to vector<8x16x128xf32>
    %15 = arith.mulf %13, %14 : vector<8x16x128xf32>
    %16 = arith.addf %9, %15 : vector<8x16x128xf32>
    %17 = vector.extract_strided_slice %1 {offsets = [0, 0, 2], sizes = [8, 16, 1], strides = [1, 1, 1]} : vector<8x16x3xf32> to vector<8x16x1xf32>
    %18 = vector.extract_strided_slice %3 {offsets = [2, 0], sizes = [1, 128], strides = [1, 1]} : vector<3x128xf32> to vector<1x128xf32>
    %19 = vector.shape_cast %18 : vector<1x128xf32> to vector<1x1x128xf32>
    %20 = vector.broadcast %17 : vector<8x16x1xf32> to vector<8x16x128xf32>
    %21 = vector.broadcast %19 : vector<1x1x128xf32> to vector<8x16x128xf32>
    %22 = arith.mulf %20, %21 : vector<8x16x128xf32>
    %23 = arith.addf %16, %22 : vector<8x16x128xf32>
    %c0_4 = arith.constant 0 : index
    %c0_5 = arith.constant 0 : index
    %24 = vector.load %arg3[%c0_4, %c0_5] : memref<1x128xf32, #tpu.memory_space<vmem>>, vector<1x128xf32>
    %25 = vector.shape_cast %24 : vector<1x128xf32> to vector<1x1x128xf32>
    %26 = vector.broadcast %25 : vector<1x1x128xf32> to vector<8x16x128xf32>
    %27 = arith.addf %23, %26 : vector<8x16x128xf32>
    %cst = arith.constant 0.00999999977 : f32
    %28 = vector.broadcast %cst : f32 to vector<8x16x128xf32>
    %29 = arith.mulf %28, %27 : vector<8x16x128xf32>
    %30 = arith.maximumf %27, %29 : vector<8x16x128xf32>
    %31 = arith.truncf %30 : vector<8x16x128xf32> to vector<8x16x128xbf16>
    %32 = vector.shape_cast %31 : vector<8x16x128xbf16> to vector<128x128xbf16>
    %c0_6 = arith.constant 0 : index
    %c0_7 = arith.constant 0 : index
    %33 = vector.load %arg4[%c0_6, %c0_7] : memref<128x128xbf16, #tpu.memory_space<vmem>>, vector<128x128xbf16>
    %cst_8 = arith.constant dense<0.000000e+00> : vector<128x128xf32>
    %34 = tpu.matmul %32, %33, %cst_8 {dimension_numbers = #tpu.dot_dimension_numbers<[1], [0], [0], [1], [0, 0, 1, 1], [], []>} : vector<128x128xbf16>, vector<128x128xbf16>, vector<128x128xf32> -> vector<128x128xf32>
    %c0_9 = arith.constant 0 : index
    %c0_10 = arith.constant 0 : index
    %35 = vector.load %arg5[%c0_9, %c0_10] : memref<1x128xf32, #tpu.memory_space<vmem>>, vector<1x128xf32>
    %36 = vector.broadcast %35 : vector<1x128xf32> to vector<128x128xf32>
    %37 = arith.addf %34, %36 : vector<128x128xf32>
    %38 = vector.shape_cast %37 : vector<128x128xf32> to vector<8x16x128xf32>
    %cst_11 = arith.constant dense<0xFF800000> : vector<16x128xf32>
    %39 = vector.multi_reduction <maximumf>, %38, %cst_11 [0] : vector<8x16x128xf32> to vector<16x128xf32>
    %cst_12 = arith.constant 0.00999999977 : f32
    %40 = vector.broadcast %cst_12 : f32 to vector<16x128xf32>
    %41 = arith.mulf %40, %39 : vector<16x128xf32>
    %42 = arith.maximumf %39, %41 : vector<16x128xf32>
    %43 = arith.truncf %42 : vector<16x128xf32> to vector<16x128xbf16>
    %c0_13 = arith.constant 0 : index
    %c0_14 = arith.constant 0 : index
    %44 = vector.load %arg6[%c0_13, %c0_14] : memref<128x128xbf16, #tpu.memory_space<vmem>>, vector<128x128xbf16>
    %cst_15 = arith.constant dense<0.000000e+00> : vector<16x128xf32>
    %45 = tpu.matmul %43, %44, %cst_15 {dimension_numbers = #tpu.dot_dimension_numbers<[1], [0], [0], [1], [0, 0, 1, 1], [], []>} : vector<16x128xbf16>, vector<128x128xbf16>, vector<16x128xf32> -> vector<16x128xf32>
    %c0_16 = arith.constant 0 : index
    %c0_17 = arith.constant 0 : index
    %46 = vector.load %arg7[%c0_16, %c0_17] : memref<1x128xf32, #tpu.memory_space<vmem>>, vector<1x128xf32>
    %47 = vector.broadcast %46 : vector<1x128xf32> to vector<16x128xf32>
    %48 = arith.addf %45, %47 : vector<16x128xf32>
    %cst_18 = arith.constant 0.00999999977 : f32
    %49 = vector.broadcast %cst_18 : f32 to vector<16x128xf32>
    %50 = arith.mulf %49, %48 : vector<16x128xf32>
    %51 = arith.maximumf %48, %50 : vector<16x128xf32>
    %52 = arith.truncf %51 : vector<16x128xf32> to vector<16x128xbf16>
    %c0_19 = arith.constant 0 : index
    %c0_20 = arith.constant 0 : index
    %53 = vector.load %arg8[%c0_19, %c0_20] : memref<128x128xbf16, #tpu.memory_space<vmem>>, vector<128x128xbf16>
    %cst_21 = arith.constant dense<0.000000e+00> : vector<16x128xf32>
    %54 = tpu.matmul %52, %53, %cst_21 {dimension_numbers = #tpu.dot_dimension_numbers<[1], [0], [0], [1], [0, 0, 1, 1], [], []>} : vector<16x128xbf16>, vector<128x128xbf16>, vector<16x128xf32> -> vector<16x128xf32>
    %c0_22 = arith.constant 0 : index
    %c0_23 = arith.constant 0 : index
    %55 = vector.load %arg9[%c0_22, %c0_23] : memref<1x128xf32, #tpu.memory_space<vmem>>, vector<1x128xf32>
    %56 = vector.broadcast %55 : vector<1x128xf32> to vector<16x128xf32>
    %57 = arith.addf %54, %56 : vector<16x128xf32>
    %58 = arith.addf %57, %42 : vector<16x128xf32>
    %cst_24 = arith.constant 0.00999999977 : f32
    %59 = vector.broadcast %cst_24 : f32 to vector<16x128xf32>
    %60 = arith.mulf %59, %58 : vector<16x128xf32>
    %61 = arith.maximumf %58, %60 : vector<16x128xf32>
    %62 = arith.truncf %61 : vector<16x128xf32> to vector<16x128xbf16>
    %c0_25 = arith.constant 0 : index
    %c0_26 = arith.constant 0 : index
    %63 = vector.load %arg10[%c0_25, %c0_26] : memref<16x128xbf16, #tpu.memory_space<vmem>>, vector<16x128xbf16>
    tpu.vector_store %arg10[%c0_25, %c0_26], %62 {strides = array<i32>} : memref<16x128xbf16, #tpu.memory_space<vmem>>, vector<16x128xbf16>,
    return
  }
  func.func @transform_0(%arg0: i32) -> (i32, i32, i32) {
    %c0_i32 = arith.constant 0 : i32
    %c0_i32_0 = arith.constant 0 : i32
    %c0_i32_1 = arith.constant 0 : i32
    return %c0_i32, %arg0, %c0_i32_0 : i32, i32, i32
  }
  func.func @transform_1(%arg0: i32) -> (i32, i32) {
    %c0_i32 = arith.constant 0 : i32
    %c0_i32_0 = arith.constant 0 : i32
    %c0_i32_1 = arith.constant 0 : i32
    return %c0_i32, %c0_i32_0 : i32, i32
  }
  func.func @transform_2(%arg0: i32) -> (i32, i32) {
    %c0_i32 = arith.constant 0 : i32
    %c0_i32_0 = arith.constant 0 : i32
    %c0_i32_1 = arith.constant 0 : i32
    return %c0_i32, %c0_i32_0 : i32, i32
  }
  func.func @transform_3(%arg0: i32) -> (i32, i32) {
    %c0_i32 = arith.constant 0 : i32
    %c0_i32_0 = arith.constant 0 : i32
    %c0_i32_1 = arith.constant 0 : i32
    return %c0_i32, %c0_i32_0 : i32, i32
  }
  func.func @transform_4(%arg0: i32) -> (i32, i32) {
    %c0_i32 = arith.constant 0 : i32
    %c0_i32_0 = arith.constant 0 : i32
    %c0_i32_1 = arith.constant 0 : i32
    return %c0_i32, %c0_i32_0 : i32, i32
  }
  func.func @transform_5(%arg0: i32) -> (i32, i32) {
    %c0_i32 = arith.constant 0 : i32
    %c0_i32_0 = arith.constant 0 : i32
    %c0_i32_1 = arith.constant 0 : i32
    return %c0_i32, %c0_i32_0 : i32, i32
  }
  func.func @transform_6(%arg0: i32) -> (i32, i32) {
    %c0_i32 = arith.constant 0 : i32
    %c0_i32_0 = arith.constant 0 : i32
    %c0_i32_1 = arith.constant 0 : i32
    return %c0_i32, %c0_i32_0 : i32, i32
  }
  func.func @transform_7(%arg0: i32) -> (i32, i32) {
    %c0_i32 = arith.constant 0 : i32
    %c0_i32_0 = arith.constant 0 : i32
    %c0_i32_1 = arith.constant 0 : i32
    return %c0_i32, %c0_i32_0 : i32, i32
  }
  func.func @transform_8(%arg0: i32) -> (i32, i32) {
    %c0_i32 = arith.constant 0 : i32
    %c0_i32_0 = arith.constant 0 : i32
    %c0_i32_1 = arith.constant 0 : i32
    return %c0_i32, %c0_i32_0 : i32, i32
  }
  func.func @transform_9(%arg0: i32) -> (i32, i32) {
    %c0_i32 = arith.constant 0 : i32
    %c0_i32_0 = arith.constant 0 : i32
    return %arg0, %c0_i32 : i32, i32
  }
}

</mosaic_0001>

<llo_original>
// kernel: tpu_custom_call.1
$region0: #{tpu_custom_call.1}
  #allocation0 [shape = 'u32[]', space=smem, size = 0x4, offset = 0x4, fixed_abs, tag = 'smem constant byte address 0x4 - core index']
  #allocation1 [shape = 'u32[144,128]{1,0:T(1,128)}', space=vmem, size = 0x12000, scoped, tag = 'internal scratch']
  %s0 = inlined_call_operand.vmem [shape: bf16[8,32,3], index: 0, kind: input, shape index: {}]
  %s1 = inlined_call_operand.vmem [shape: bf16[3,128], index: 1, kind: input, shape index: {}]
  %s2 = inlined_call_operand.vmem [shape: f32[1,128], index: 2, kind: input, shape index: {}]
  %s3 = inlined_call_operand.vmem [shape: bf16[128,128], index: 3, kind: input, shape index: {}]
  %s4 = inlined_call_operand.vmem [shape: f32[1,128], index: 4, kind: input, shape index: {}]
  %s5 = inlined_call_operand.vmem [shape: bf16[128,128], index: 5, kind: input, shape index: {}]
  %s6 = inlined_call_operand.vmem [shape: f32[1,128], index: 6, kind: input, shape index: {}]
  %s7 = inlined_call_operand.hbm [shape: bf16[128,128], index: 7, kind: input, shape index: {}]
  %s8 = inlined_call_operand.vmem [shape: f32[1,128], index: 8, kind: input, shape index: {}]
  %s9 = inlined_call_operand.hbm [shape: bf16[32,128], index: 9, kind: output, shape index: {}]
  %s10 = sld [smem:[#allocation0]]
  $region114: #{tpu_custom_call.1} parent=0
    _
  %s12 = ssub.s32 1, %s10
  %s13 = scalar_select 0, %s12, %s10
  $region1: #{tpu_custom_call.1} parent=0
    #allocation2 [shape = 'u8[65536]{0}', space=vmem, size = 0x10000, scoped, tag = 'input window, operand 0']
    #allocation3 [shape = 'u8[32768]{0}', space=vmem, size = 0x8000, scoped, tag = 'input window, operand 7, single buffered']
    #allocation4 [shape = 's32[2]{0}', space=sflag, size = 0x8, scoped, tag = 'scoped memory for tpu_custom_call.1']
    #allocation5 [shape = 's32[2]{0}', space=sflag, size = 0x8, scoped, tag = 'scoped memory for tpu_custom_call.1']
    #allocation6 [shape = 'u8[8192]{0}', space=vmem, size = 0x2000, scoped, tag = 'output window, operand 0']
    %14 = vsyncpa [#allocation4], 0
    %15 = vsyncpa [#allocation5], 0
    %s16 = scalar_lea.sflag [#allocation5], 1
    %17 = vsyncpa %s16, 0
    loop: start=0, step=1, limit=4
    $region2: #{tpu_custom_call.1} parent=1 // loop_pre_header
      _
    $region3: #{tpu_custom_call.1} parent=1 // loop_header
      %s19 = sphi 0, %s23
      %p20 = scmp.ge.s32.totalorder %s19, 4
      %s29 = sphi 0, %s31
      %s32 = sphi 0, %s29
      %s33 = sphi 0, %s32
      %s49 = sphi 0, %s33
      %s53 = sphi 0, %s53
      %s55 = sphi 0, %s53
      %s56 = sphi 0, %s55
      %s70 = sphi 0, %s56
      %s74 = sphi 0, %s74
      %s76 = sphi 0, %s74
      %s77 = sphi 0, %s76
      %s91 = sphi 0, %s77
      %s95 = sphi 0, %s95
      %s97 = sphi 0, %s95
      %s98 = sphi 0, %s97
      %s112 = sphi 0, %s98
      %s116 = sphi 0, %s116
      %s118 = sphi 0, %s116
      %s119 = sphi 0, %s118
      %s133 = sphi 0, %s119
      %s137 = sphi 0, %s137
      %s139 = sphi 0, %s137
      %s140 = sphi 0, %s139
      %s154 = sphi 0, %s140
      %s158 = sphi 0, %s158
      %s160 = sphi 0, %s158
      %s161 = sphi 0, %s160
      %s175 = sphi 0, %s161
      %s179 = sphi 0, %s179
      %s181 = sphi 0, %s179
      %s182 = sphi 0, %s181
      %s196 = sphi 0, %s182
      %s200 = sphi 0, %s200
      %s202 = sphi 0, %s200
      %s203 = sphi 0, %s202
      %s217 = sphi 0, %s203
      %s223 = sphi 0, %s225
      %s226 = sphi 0, %s223
      %s227 = sphi 0, %s226
      %s243 = sphi 0, %s227
    $region4: #{tpu_custom_call.1} parent=1 // loop_header_branch
      %22 = sbr.rel (%p20) target = $region8
    $region5: #{tpu_custom_call.1} parent=1 // loop_body
      %s24 = ssub.s32 %s19, 1
      %s25 = ssub.s32 %s19, 2
      %s26 = sadd.s32 %s19, 1
      %s27 = ssub.s32 %s19, %s26
      %p28 = scmp.eq.s32.totalorder %s27, 0
      %s30 = sadd.s32 %s29, 1
      %s31 = scalar_select %p28, %s29, %s30
      %p34 = pneg %p28
      %p35 = scmp.eq.s32.totalorder %s19, 1
      %p36 = por %p34, %p35
      %p37 = scmp.ne.s32.totalorder %s29, %s32
      %p38 = scmp.eq.s32.totalorder %s19, 0
      %p39 = por %p37, %p38
      %p40 = scmp.ne.s32.totalorder %s29, %s32
      %p41 = scmp.eq.s32.totalorder %s24, 1
      %p42 = por %p40, %p41
      %p43 = scmp.ne.s32.totalorder %s32, %s33
      %p44 = scmp.eq.s32.totalorder %s24, 0
      %p45 = por %p43, %p44
      %p46 = scmp.ne.s32.totalorder %s32, %s33
      %p47 = scmp.eq.s32.totalorder %s25, 1
      %p48 = por %p46, %p47
      %p50 = scmp.ne.s32.totalorder %s33, %s49
      %p51 = scmp.eq.s32.totalorder %s25, 0
      %p52 = por %p50, %p51
      %s54 = sadd.s32 %s53, 1
      %p57 = scmp.eq.s32.totalorder %s19, 1
      %p58 = scmp.ne.s32.totalorder %s53, %s55
      %p59 = scmp.eq.s32.totalorder %s19, 0
      %p60 = por %p58, %p59
      %p61 = scmp.ne.s32.totalorder %s53, %s55
      %p62 = scmp.eq.s32.totalorder %s24, 1
      %p63 = por %p61, %p62
      %p64 = scmp.ne.s32.totalorder %s55, %s56
      %p65 = scmp.eq.s32.totalorder %s24, 0
      %p66 = por %p64, %p65
      %p67 = scmp.ne.s32.totalorder %s55, %s56
      %p68 = scmp.eq.s32.totalorder %s25, 1
      %p69 = por %p67, %p68
      %p71 = scmp.ne.s32.totalorder %s56, %s70
      %p72 = scmp.eq.s32.totalorder %s25, 0
      %p73 = por %p71, %p72
      %s75 = sadd.s32 %s74, 1
      %p78 = scmp.eq.s32.totalorder %s19, 1
      %p79 = scmp.ne.s32.totalorder %s74, %s76
      %p80 = scmp.eq.s32.totalorder %s19, 0
      %p81 = por %p79, %p80
      %p82 = scmp.ne.s32.totalorder %s74, %s76
      %p83 = scmp.eq.s32.totalorder %s24, 1
      %p84 = por %p82, %p83
      %p85 = scmp.ne.s32.totalorder %s76, %s77
      %p86 = scmp.eq.s32.totalorder %s24, 0
      %p87 = por %p85, %p86
      %p88 = scmp.ne.s32.totalorder %s76, %s77
      %p89 = scmp.eq.s32.totalorder %s25, 1
      %p90 = por %p88, %p89
      %p92 = scmp.ne.s32.totalorder %s77, %s91
      %p93 = scmp.eq.s32.totalorder %s25, 0
      %p94 = por %p92, %p93
      %s96 = sadd.s32 %s95, 1
      %p99 = scmp.eq.s32.totalorder %s19, 1
      %p100 = scmp.ne.s32.totalorder %s95, %s97
      %p101 = scmp.eq.s32.totalorder %s19, 0
      %p102 = por %p100, %p101
      %p103 = scmp.ne.s32.totalorder %s95, %s97
      %p104 = scmp.eq.s32.totalorder %s24, 1
      %p105 = por %p103, %p104
      %p106 = scmp.ne.s32.totalorder %s97, %s98
      %p107 = scmp.eq.s32.totalorder %s24, 0
      %p108 = por %p106, %p107
      %p109 = scmp.ne.s32.totalorder %s97, %s98
      %p110 = scmp.eq.s32.totalorder %s25, 1
      %p111 = por %p109, %p110
      %p113 = scmp.ne.s32.totalorder %s98, %s112
      %p114 = scmp.eq.s32.totalorder %s25, 0
      %p115 = por %p113, %p114
      %s117 = sadd.s32 %s116, 1
      %p120 = scmp.eq.s32.totalorder %s19, 1
      %p121 = scmp.ne.s32.totalorder %s116, %s118
      %p122 = scmp.eq.s32.totalorder %s19, 0
      %p123 = por %p121, %p122
      %p124 = scmp.ne.s32.totalorder %s116, %s118
      %p125 = scmp.eq.s32.totalorder %s24, 1
      %p126 = por %p124, %p125
      %p127 = scmp.ne.s32.totalorder %s118, %s119
      %p128 = scmp.eq.s32.totalorder %s24, 0
      %p129 = por %p127, %p128
      %p130 = scmp.ne.s32.totalorder %s118, %s119
      %p131 = scmp.eq.s32.totalorder %s25, 1
      %p132 = por %p130, %p131
      %p134 = scmp.ne.s32.totalorder %s119, %s133
      %p135 = scmp.eq.s32.totalorder %s25, 0
      %p136 = por %p134, %p135
      %s138 = sadd.s32 %s137, 1
      %p141 = scmp.eq.s32.totalorder %s19, 1
      %p142 = scmp.ne.s32.totalorder %s137, %s139
      %p143 = scmp.eq.s32.totalorder %s19, 0
      %p144 = por %p142, %p143
      %p145 = scmp.ne.s32.totalorder %s137, %s139
      %p146 = scmp.eq.s32.totalorder %s24, 1
      %p147 = por %p145, %p146
      %p148 = scmp.ne.s32.totalorder %s139, %s140
      %p149 = scmp.eq.s32.totalorder %s24, 0
      %p150 = por %p148, %p149
      %p151 = scmp.ne.s32.totalorder %s139, %s140
      %p152 = scmp.eq.s32.totalorder %s25, 1
      %p153 = por %p151, %p152
      %p155 = scmp.ne.s32.totalorder %s140, %s154
      %p156 = scmp.eq.s32.totalorder %s25, 0
      %p157 = por %p155, %p156
      %s159 = sadd.s32 %s158, 1
      %p162 = scmp.eq.s32.totalorder %s19, 1
      %p163 = scmp.ne.s32.totalorder %s158, %s160
      %p164 = scmp.eq.s32.totalorder %s19, 0
      %p165 = por %p163, %p164
      %p166 = scmp.ne.s32.totalorder %s158, %s160
      %p167 = scmp.eq.s32.totalorder %s24, 1
      %p168 = por %p166, %p167
      %p169 = scmp.ne.s32.totalorder %s160, %s161
      %p170 = scmp.eq.s32.totalorder %s24, 0
      %p171 = por %p169, %p170
      %p172 = scmp.ne.s32.totalorder %s160, %s161
      %p173 = scmp.eq.s32.totalorder %s25, 1
      %p174 = por %p172, %p173
      %p176 = scmp.ne.s32.totalorder %s161, %s175
      %p177 = scmp.eq.s32.totalorder %s25, 0
      %p178 = por %p176, %p177
      %s180 = sadd.s32 %s179, 1
      %p183 = scmp.eq.s32.totalorder %s19, 1
      %p184 = scmp.ne.s32.totalorder %s179, %s181
      %p185 = scmp.eq.s32.totalorder %s19, 0
      %p186 = por %p184, %p185
      %p187 = scmp.ne.s32.totalorder %s179, %s181
      %p188 = scmp.eq.s32.totalorder %s24, 1
      %p189 = por %p187, %p188
      %p190 = scmp.ne.s32.totalorder %s181, %s182
      %p191 = scmp.eq.s32.totalorder %s24, 0
      %p192 = por %p190, %p191
      %p193 = scmp.ne.s32.totalorder %s181, %s182
      %p194 = scmp.eq.s32.totalorder %s25, 1
      %p195 = por %p193, %p194
      %p197 = scmp.ne.s32.totalorder %s182, %s196
      %p198 = scmp.eq.s32.totalorder %s25, 0
      %p199 = por %p197, %p198
      %s201 = sadd.s32 %s200, 1
      %p204 = scmp.eq.s32.totalorder %s19, 1
      %p205 = scmp.ne.s32.totalorder %s200, %s202
      %p206 = scmp.eq.s32.totalorder %s19, 0
      %p207 = por %p205, %p206
      %p208 = scmp.ne.s32.totalorder %s200, %s202
      %p209 = scmp.eq.s32.totalorder %s24, 1
      %p210 = por %p208, %p209
      %p211 = scmp.ne.s32.totalorder %s202, %s203
      %p212 = scmp.eq.s32.totalorder %s24, 0
      %p213 = por %p211, %p212
      %p214 = scmp.ne.s32.totalorder %s202, %s203
      %p215 = scmp.eq.s32.totalorder %s25, 1
      %p216 = por %p214, %p215
      %p218 = scmp.ne.s32.totalorder %s203, %s217
      %p219 = scmp.eq.s32.totalorder %s25, 0
      %p220 = por %p218, %p219
      %s221 = ssub.s32 %s19, %s26
      %p222 = scmp.eq.s32.totalorder %s221, 0
      %s224 = sadd.s32 %s223, 1
      %s225 = scalar_select %p222, %s223, %s224
      %p228 = pneg %p222
      %p229 = scmp.eq.s32.totalorder %s19, 1
      %p230 = por %p228, %p229
      %p231 = scmp.ne.s32.totalorder %s223, %s226
      %p232 = scmp.eq.s32.totalorder %s19, 0
      %p233 = por %p231, %p232
      %p234 = scmp.ne.s32.totalorder %s223, %s226
      %p235 = scmp.eq.s32.totalorder %s24, 1
      %p236 = por %p234, %p235
      %p237 = scmp.ne.s32.totalorder %s226, %s227
      %p238 = scmp.eq.s32.totalorder %s24, 0
      %p239 = por %p237, %p238
      %p240 = scmp.ne.s32.totalorder %s226, %s227
      %p241 = scmp.eq.s32.totalorder %s25, 1
      %p242 = por %p240, %p241
      %p244 = scmp.ne.s32.totalorder %s227, %s243
      %p245 = scmp.eq.s32.totalorder %s25, 0
      %p246 = por %p244, %p245
      %p247 = scmp.le.s32.totalorder 1, %s19
      %p248 = scmp.lt.s32.totalorder %s19, 3
      %p249 = pnand %p247, %p248
      %p250 = pneg %p249
      // Predicated region
      $region9: #{tpu_custom_call.1} parent=5 // pred_check
        _
      $region10: #{tpu_custom_call.1} parent=5 // pred_check_branch
        %252 = sbr.rel (%p249) target = $region12
      $region11: #{tpu_custom_call.1} parent=5 // pred_region
        %s253 = ssub.s32 %s19, 1
        // Predicated region
        $region13: #{tpu_custom_call.1} parent=11 // pred_check
          %p254 = pneg %p66
        $region14: #{tpu_custom_call.1} parent=11 // pred_check_branch
          %256 = sbr.rel (%p254) target = $region16
        $region15: #{tpu_custom_call.1} parent=11 // pred_region
          _
        $region16: #{tpu_custom_call.1} parent=11 // pred_fallthru
          _
        // Predicated region
        $region17: #{tpu_custom_call.1} parent=11 // pred_check
          %p257 = pneg %p87
        $region18: #{tpu_custom_call.1} parent=11 // pred_check_branch
          %259 = sbr.rel (%p257) target = $region20
        $region19: #{tpu_custom_call.1} parent=11 // pred_region
          _
        $region20: #{tpu_custom_call.1} parent=11 // pred_fallthru
          _
        // Predicated region
        $region21: #{tpu_custom_call.1} parent=11 // pred_check
          %p260 = pneg %p108
        $region22: #{tpu_custom_call.1} parent=11 // pred_check_branch
          %262 = sbr.rel (%p260) target = $region24
        $region23: #{tpu_custom_call.1} parent=11 // pred_region
          _
        $region24: #{tpu_custom_call.1} parent=11 // pred_fallthru
          _
        // Predicated region
        $region25: #{tpu_custom_call.1} parent=11 // pred_check
          %p263 = pneg %p129
        $region26: #{tpu_custom_call.1} parent=11 // pred_check_branch
          %265 = sbr.rel (%p263) target = $region28
        $region27: #{tpu_custom_call.1} parent=11 // pred_region
          _
        $region28: #{tpu_custom_call.1} parent=11 // pred_fallthru
          _
        // Predicated region
        $region29: #{tpu_custom_call.1} parent=11 // pred_check
          %p266 = pneg %p150
        $region30: #{tpu_custom_call.1} parent=11 // pred_check_branch
          %268 = sbr.rel (%p266) target = $region32
        $region31: #{tpu_custom_call.1} parent=11 // pred_region
          _
        $region32: #{tpu_custom_call.1} parent=11 // pred_fallthru
          _
        // Predicated region
        $region33: #{tpu_custom_call.1} parent=11 // pred_check
          %p269 = pneg %p171
        $region34: #{tpu_custom_call.1} parent=11 // pred_check_branch
          %271 = sbr.rel (%p269) target = $region36
        $region35: #{tpu_custom_call.1} parent=11 // pred_region
          _
        $region36: #{tpu_custom_call.1} parent=11 // pred_fallthru
          _
        // Predicated region
        $region37: #{tpu_custom_call.1} parent=11 // pred_check
          %p272 = pneg %p192
        $region38: #{tpu_custom_call.1} parent=11 // pred_check_branch
          %274 = sbr.rel (%p272) target = $region40
        $region39: #{tpu_custom_call.1} parent=11 // pred_region
          %s276 = ssub.s32 1024, 1024
          %277 = vsyncadd [#allocation4], %s276
          %s278 = sshll.u32 [#allocation3], 4
          %s279 = int_to_ptr.vmem [resolvable:$true] %s278
          %284 = dma.hbm_to_vmem [thread:$0]  %s7, 1024, %s279, [#allocation4], 64, 64, 4
        $region40: #{tpu_custom_call.1} parent=11 // pred_fallthru
          _
        // Predicated region
        $region41: #{tpu_custom_call.1} parent=11 // pred_check
          %p285 = pneg %p213
        $region42: #{tpu_custom_call.1} parent=11 // pred_check_branch
          %287 = sbr.rel (%p285) target = $region44
        $region43: #{tpu_custom_call.1} parent=11 // pred_region
          _
        $region44: #{tpu_custom_call.1} parent=11 // pred_fallthru
          _
      $region12: #{tpu_custom_call.1} parent=5 // pred_fallthru
        _
      %p288 = scmp.lt.s32.totalorder %s19, 2
      // Predicated region
      $region45: #{tpu_custom_call.1} parent=5 // pred_check
        %p289 = pneg %p288
      $region46: #{tpu_custom_call.1} parent=5 // pred_check_branch
        %291 = sbr.rel (%p289) target = $region48
      $region47: #{tpu_custom_call.1} parent=5 // pred_region
        // Predicated region
        $region49: #{tpu_custom_call.1} parent=47 // pred_check
          %p292 = pneg %p39
        $region50: #{tpu_custom_call.1} parent=47 // pred_check_branch
          %294 = sbr.rel (%p292) target = $region52
        $region51: #{tpu_custom_call.1} parent=47 // pred_region
          %s295 = sand.u32 %s29, 1
          %s296 = sand.u32 %s29, 1
          %s297 = smul.addr %s296, 64
          %s298 = scalar_lea.vmem [#allocation2], %s297
          %s299 = smul.u32 2, %s19
          %s300 = smul.addr %s299, 4
          %s301 = scalar_lea.vmem %s0, %s300
          // Predicated region
          $region53: #{tpu_custom_call.1} parent=51 // pred_check
            _
          $region54: #{tpu_custom_call.1} parent=51 // pred_check_branch
            %303 = sbr.rel (0) target = $region56
          $region55: #{tpu_custom_call.1} parent=51 // pred_region
            // Predicated region
            $region57: #{tpu_custom_call.1} parent=55 // pred_check
              _
            $region58: #{tpu_custom_call.1} parent=55 // pred_check_branch
              %305 = sbr.rel target = $region60
            $region59: #{tpu_custom_call.1} parent=55 // pred_region
              // Predicated region
              $region72: #{tpu_custom_call.1} parent=59 // pred_check
                _
              $region73: #{tpu_custom_call.1} parent=59 // pred_check_branch
                %351 = sbr.rel (0) target = $region75
              $region74: #{tpu_custom_call.1} parent=59 // pred_region
                loop: start=0, step=1, limit=1
                $region76: #{tpu_custom_call.1} parent=74 // loop_pre_header
                  _
                $region77: #{tpu_custom_call.1} parent=74 // loop_header
                  %s353 = sphi 0, %s357
                  %p354 = scmp.ge.s32.totalorder %s353, 1
                  %s358 = sphi %s301, %s301
                  %s359 = sphi %s298, %s298
                $region78: #{tpu_custom_call.1} parent=74 // loop_header_branch
                  %356 = sbr.rel (%p354) target = $region82
                $region79: #{tpu_custom_call.1} parent=74 // loop_body
                  _
                $region80: #{tpu_custom_call.1} parent=74 // loop_footer
                  %s357 = sadd.s32 1, %s353
                $region81: #{tpu_custom_call.1} parent=74 // loop_footer_branch
                  %352 = sbr.rel target = $region77
                $region82: #{tpu_custom_call.1} parent=74 // loop_exit
                  _
                %s361 = ssub.s32 16, 1
                loop: start=0, step=1, limit=1
                $region83: #{tpu_custom_call.1} parent=74 // loop_pre_header
                  _
                $region84: #{tpu_custom_call.1} parent=74 // loop_header
                  %s363 = sphi 0, %s367
                  %p364 = scmp.ge.s32.totalorder %s363, 1
                  %s368 = sphi %s301, %s301
                  %s369 = sphi %s298, %s298
                $region85: #{tpu_custom_call.1} parent=74 // loop_header_branch
                  %366 = sbr.rel (%p364) target = $region89
                $region86: #{tpu_custom_call.1} parent=74 // loop_body
                  %v370 = vld [vmem:[%s368] sm:%s361]
                  %371 = vst [vmem:[%s369] sm:%s361] %v370
                  %v372 = vld [vmem:[%s368 + $0x4] sm:%s361]
                  %373 = vst [vmem:[%s369 + $0x4] sm:%s361] %v372
                  %v374 = vld [vmem:[%s368 + $0x10] sm:%s361]
                  %375 = vst [vmem:[%s369 + $0x8] sm:%s361] %v374
                  %v376 = vld [vmem:[%s368 + $0x14] sm:%s361]
                  %377 = vst [vmem:[%s369 + $0xc] sm:%s361] %v376
                  %v378 = vld [vmem:[%s368 + $0x20] sm:%s361]
                  %379 = vst [vmem:[%s369 + $0x10] sm:%s361] %v378
                  %v380 = vld [vmem:[%s368 + $0x24] sm:%s361]
                  %381 = vst [vmem:[%s369 + $0x14] sm:%s361] %v380
                  %v382 = vld [vmem:[%s368 + $0x30] sm:%s361]
                  %383 = vst [vmem:[%s369 + $0x18] sm:%s361] %v382
                  %v384 = vld [vmem:[%s368 + $0x34] sm:%s361]
                  %385 = vst [vmem:[%s369 + $0x1c] sm:%s361] %v384
                  %v386 = vld [vmem:[%s368 + $0x40] sm:%s361]
                  %387 = vst [vmem:[%s369 + $0x20] sm:%s361] %v386
                  %v388 = vld [vmem:[%s368 + $0x44] sm:%s361]
                  %389 = vst [vmem:[%s369 + $0x24] sm:%s361] %v388
                  %v390 = vld [vmem:[%s368 + $0x50] sm:%s361]
                  %391 = vst [vmem:[%s369 + $0x28] sm:%s361] %v390
                  %v392 = vld [vmem:[%s368 + $0x54] sm:%s361]
                  %393 = vst [vmem:[%s369 + $0x2c] sm:%s361] %v392
                  %v394 = vld [vmem:[%s368 + $0x60] sm:%s361]
                  %395 = vst [vmem:[%s369 + $0x30] sm:%s361] %v394
                  %v396 = vld [vmem:[%s368 + $0x64] sm:%s361]
                  %397 = vst [vmem:[%s369 + $0x34] sm:%s361] %v396
                  %v398 = vld [vmem:[%s368 + $0x70] sm:%s361]
                  %399 = vst [vmem:[%s369 + $0x38] sm:%s361] %v398
                  %v400 = vld [vmem:[%s368 + $0x74] sm:%s361]
                  %401 = vst [vmem:[%s369 + $0x3c] sm:%s361] %v400
                $region87: #{tpu_custom_call.1} parent=74 // loop_footer
                  %s367 = sadd.s32 1, %s363
                $region88: #{tpu_custom_call.1} parent=74 // loop_footer_branch
                  %362 = sbr.rel target = $region84
                $region89: #{tpu_custom_call.1} parent=74 // loop_exit
                  _
              $region75: #{tpu_custom_call.1} parent=59 // pred_fallthru
                _
            $region60: #{tpu_custom_call.1} parent=55 // pred_fallthru
              _
            // Predicated region
            $region61: #{tpu_custom_call.1} parent=55 // pred_check
              _
            $region62: #{tpu_custom_call.1} parent=55 // pred_check_branch
              %307 = sbr.rel (0) target = $region64
            $region63: #{tpu_custom_call.1} parent=55 // pred_region
              %s309 = ssub.s32 16, 1
              loop: start=0, step=1, limit=1
              $region65: #{tpu_custom_call.1} parent=63 // loop_pre_header
                _
              $region66: #{tpu_custom_call.1} parent=63 // loop_header
                %s311 = sphi 0, %s315
                %p312 = scmp.ge.s32.totalorder %s311, 1
                %s316 = sphi %s301, %s301
                %s317 = sphi %s298, %s298
              $region67: #{tpu_custom_call.1} parent=63 // loop_header_branch
                %314 = sbr.rel (%p312) target = $region71
              $region68: #{tpu_custom_call.1} parent=63 // loop_body
                %v318 = vld [vmem:[%s316] sm:%s309]
                %319 = vst [vmem:[%s317] sm:%s309] %v318
                %v320 = vld [vmem:[%s316 + $0x4] sm:%s309]
                %321 = vst [vmem:[%s317 + $0x4] sm:%s309] %v320
                %v322 = vld [vmem:[%s316 + $0x10] sm:%s309]
                %323 = vst [vmem:[%s317 + $0x8] sm:%s309] %v322
                %v324 = vld [vmem:[%s316 + $0x14] sm:%s309]
                %325 = vst [vmem:[%s317 + $0xc] sm:%s309] %v324
                %v326 = vld [vmem:[%s316 + $0x20] sm:%s309]
                %327 = vst [vmem:[%s317 + $0x10] sm:%s309] %v326
                %v328 = vld [vmem:[%s316 + $0x24] sm:%s309]
                %329 = vst [vmem:[%s317 + $0x14] sm:%s309] %v328
                %v330 = vld [vmem:[%s316 + $0x30] sm:%s309]
                %331 = vst [vmem:[%s317 + $0x18] sm:%s309] %v330
                %v332 = vld [vmem:[%s316 + $0x34] sm:%s309]
                %333 = vst [vmem:[%s317 + $0x1c] sm:%s309] %v332
                %v334 = vld [vmem:[%s316 + $0x40] sm:%s309]
                %335 = vst [vmem:[%s317 + $0x20] sm:%s309] %v334
                %v336 = vld [vmem:[%s316 + $0x44] sm:%s309]
                %337 = vst [vmem:[%s317 + $0x24] sm:%s309] %v336
                %v338 = vld [vmem:[%s316 + $0x50] sm:%s309]
                %339 = vst [vmem:[%s317 + $0x28] sm:%s309] %v338
                %v340 = vld [vmem:[%s316 + $0x54] sm:%s309]
                %341 = vst [vmem:[%s317 + $0x2c] sm:%s309] %v340
                %v342 = vld [vmem:[%s316 + $0x60] sm:%s309]
                %343 = vst [vmem:[%s317 + $0x30] sm:%s309] %v342
                %v344 = vld [vmem:[%s316 + $0x64] sm:%s309]
                %345 = vst [vmem:[%s317 + $0x34] sm:%s309] %v344
                %v346 = vld [vmem:[%s316 + $0x70] sm:%s309]
                %347 = vst [vmem:[%s317 + $0x38] sm:%s309] %v346
                %v348 = vld [vmem:[%s316 + $0x74] sm:%s309]
                %349 = vst [vmem:[%s317 + $0x3c] sm:%s309] %v348
              $region69: #{tpu_custom_call.1} parent=63 // loop_footer
                %s315 = sadd.s32 1, %s311
              $region70: #{tpu_custom_call.1} parent=63 // loop_footer_branch
                %310 = sbr.rel target = $region66
              $region71: #{tpu_custom_call.1} parent=63 // loop_exit
                _
            $region64: #{tpu_custom_call.1} parent=55 // pred_fallthru
              _
          $region56: #{tpu_custom_call.1} parent=51 // pred_fallthru
            _
          %402 = vnop
        $region52: #{tpu_custom_call.1} parent=47 // pred_fallthru
          _
      $region48: #{tpu_custom_call.1} parent=5 // pred_fallthru
        _
      %p403 = scmp.le.s32.totalorder 1, %s19
      %p404 = scmp.lt.s32.totalorder %s19, 3
      %p405 = pnand %p403, %p404
      %p406 = pneg %p405
      // Predicated region
      $region90: #{tpu_custom_call.1} parent=5 // pred_check
        _
      $region91: #{tpu_custom_call.1} parent=5 // pred_check_branch
        %408 = sbr.rel (%p405) target = $region93
      $region92: #{tpu_custom_call.1} parent=5 // pred_region
        %s409 = ssub.s32 %s19, 1
        %s410 = sand.u32 %s32, 1
        %s411 = sand.u32 %s32, 1
        %s412 = smul.addr %s411, 64
        %s413 = scalar_lea.vmem [#allocation2], %s412
        // Predicated region
        $region94: #{tpu_custom_call.1} parent=92 // pred_check
          %p414 = pneg %p45
        $region95: #{tpu_custom_call.1} parent=92 // pred_check_branch
          %416 = sbr.rel (%p414) target = $region97
        $region96: #{tpu_custom_call.1} parent=92 // pred_region
          _
        $region97: #{tpu_custom_call.1} parent=92 // pred_fallthru
          _
        // Predicated region
        $region98: #{tpu_custom_call.1} parent=92 // pred_check
          %p417 = pneg %p192
        $region99: #{tpu_custom_call.1} parent=92 // pred_check_branch
          %419 = sbr.rel (%p417) target = $region101
        $region100: #{tpu_custom_call.1} parent=92 // pred_region
          %420 = dma.done [#allocation4], 1024
        $region101: #{tpu_custom_call.1} parent=92 // pred_fallthru
          _
        %s421 = sand.u32 %s32, 1
        %s422 = sand.u32 %s32, 1
        %s423 = smul.addr %s422, 64
        %s424 = scalar_lea.vmem [#allocation2], %s423
        %p425 = pneg %p45
        %p426 = pneg %p42
        %p427 = pneg %p66
        %p428 = pneg %p63
        %p429 = pneg %p87
        %p430 = pneg %p84
        %p431 = pneg %p108
        %p432 = pneg %p105
        %p433 = pneg %p129
        %p434 = pneg %p126
        %p435 = pneg %p150
        %p436 = pneg %p147
        %p437 = pneg %p171
        %p438 = pneg %p168
        %p439 = pneg %p192
        %p440 = pneg %p189
        %p441 = pneg %p213
        %p442 = pneg %p210
        %p443 = pneg %p239
        %p444 = pneg %p236
        %s445 = sand.u32 %s226, 1
        %s446 = scalar_lea.sflag [#allocation5], %s445
        %s447 = sand.u32 %s226, 1
        %s448 = smul.addr %s447, 8
        %s449 = scalar_lea.vmem [#allocation6], %s448
        %s450 = smul.u32 2, %s24
        %s451 = smul.u32 2, %s24
        %v453 = vld [vmem:[%s413] sm:$0xf]
        %v454 = vld [vmem:[%s413 + $0x4] sm:$0xf]
        %v455 = vld [vmem:[%s413 + $0x8] sm:$0xf]
        %v456 = vld [vmem:[%s413 + $0xc] sm:$0xf]
        %v457 = vld [vmem:[%s413 + $0x10] sm:$0xf]
        %v458 = vld [vmem:[%s413 + $0x14] sm:$0xf]
        %v459 = vld [vmem:[%s413 + $0x18] sm:$0xf]
        %v460 = vld [vmem:[%s413 + $0x1c] sm:$0xf]
        %v461 = vld [vmem:[%s413 + $0x20] sm:$0xf]
        %v462 = vld [vmem:[%s413 + $0x24] sm:$0xf]
        %v463 = vld [vmem:[%s413 + $0x28] sm:$0xf]
        %v464 = vld [vmem:[%s413 + $0x2c] sm:$0xf]
        %v465 = vld [vmem:[%s413 + $0x30] sm:$0xf]
        %v466 = vld [vmem:[%s413 + $0x34] sm:$0xf]
        %v467 = vld [vmem:[%s413 + $0x38] sm:$0xf]
        %v468 = vld [vmem:[%s413 + $0x3c] sm:$0xf]
        %v469 = vunpack.c.l.bf16 %v453
        %v470 = vunpack.c.l.bf16 %v454
        %v471 = vunpack.c.l.bf16 %v455
        %v472 = vunpack.c.l.bf16 %v456
        %v473 = vunpack.c.l.bf16 %v457
        %v474 = vunpack.c.l.bf16 %v458
        %v475 = vunpack.c.l.bf16 %v459
        %v476 = vunpack.c.l.bf16 %v460
        %v477 = vunpack.c.l.bf16 %v461
        %v478 = vunpack.c.l.bf16 %v462
        %v479 = vunpack.c.l.bf16 %v463
        %v480 = vunpack.c.l.bf16 %v464
        %v481 = vunpack.c.l.bf16 %v465
        %v482 = vunpack.c.l.bf16 %v466
        %v483 = vunpack.c.l.bf16 %v467
        %v484 = vunpack.c.l.bf16 %v468
        %v485 = vld [vmem:[%s1] sm:$0x3]
        %v486 = vunpack.c.l.bf16 %v485
        %488 = vset.pattern.permute.xlu0 0
        %489 = vperm.xlu0 %488, %v469
        %v490 = vpop.permute.xlu0 %489
        %493 = vset.pattern.permute.xlu0 0
        %494 = vperm.xlu0 %493, %v470
        %v495 = vpop.permute.xlu0 %494
        %498 = vset.pattern.permute.xlu0 0
        %499 = vperm.xlu0 %498, %v471
        %v500 = vpop.permute.xlu0 %499
        %503 = vset.pattern.permute.xlu0 0
        %504 = vperm.xlu0 %503, %v472
        %v505 = vpop.permute.xlu0 %504
        %508 = vset.pattern.permute.xlu0 0
        %509 = vperm.xlu0 %508, %v473
        %v510 = vpop.permute.xlu0 %509
        %513 = vset.pattern.permute.xlu0 0
        %514 = vperm.xlu0 %513, %v474
        %v515 = vpop.permute.xlu0 %514
        %518 = vset.pattern.permute.xlu0 0
        %519 = vperm.xlu0 %518, %v475
        %v520 = vpop.permute.xlu0 %519
        %523 = vset.pattern.permute.xlu0 0
        %524 = vperm.xlu0 %523, %v476
        %v525 = vpop.permute.xlu0 %524
        %528 = vset.pattern.permute.xlu0 0
        %529 = vperm.xlu0 %528, %v477
        %v530 = vpop.permute.xlu0 %529
        %533 = vset.pattern.permute.xlu0 0
        %534 = vperm.xlu0 %533, %v478
        %v535 = vpop.permute.xlu0 %534
        %538 = vset.pattern.permute.xlu0 0
        %539 = vperm.xlu0 %538, %v479
        %v540 = vpop.permute.xlu0 %539
        %543 = vset.pattern.permute.xlu0 0
        %544 = vperm.xlu0 %543, %v480
        %v545 = vpop.permute.xlu0 %544
        %548 = vset.pattern.permute.xlu0 0
        %549 = vperm.xlu0 %548, %v481
        %v550 = vpop.permute.xlu0 %549
        %553 = vset.pattern.permute.xlu0 0
        %554 = vperm.xlu0 %553, %v482
        %v555 = vpop.permute.xlu0 %554
        %558 = vset.pattern.permute.xlu0 0
        %559 = vperm.xlu0 %558, %v483
        %v560 = vpop.permute.xlu0 %559
        %563 = vset.pattern.permute.xlu0 0
        %564 = vperm.xlu0 %563, %v484
        %v565 = vpop.permute.xlu0 %564
        %v567 = vlaneseq
        %v568 = vshrl.u32 %v567, 7
        %v569 = vsub.s32 0, %v568
        %v570 = vrot.slane %v486, %v569
        %v571 = vmul.f32 %v490, %v570
        %v572 = vmul.f32 %v495, %v570
        %v573 = vmul.f32 %v500, %v570
        %v574 = vmul.f32 %v505, %v570
        %v575 = vmul.f32 %v510, %v570
        %v576 = vmul.f32 %v515, %v570
        %v577 = vmul.f32 %v520, %v570
        %v578 = vmul.f32 %v525, %v570
        %v579 = vmul.f32 %v530, %v570
        %v580 = vmul.f32 %v535, %v570
        %v581 = vmul.f32 %v540, %v570
        %v582 = vmul.f32 %v545, %v570
        %v583 = vmul.f32 %v550, %v570
        %v584 = vmul.f32 %v555, %v570
        %v585 = vmul.f32 %v560, %v570
        %v586 = vmul.f32 %v565, %v570
        %587 = vset.pattern.permute.xlu0 1
        %588 = vperm.xlu0 %587, %v469
        %v589 = vpop.permute.xlu0 %588
        %591 = vset.pattern.permute.xlu0 1
        %592 = vperm.xlu0 %591, %v470
        %v593 = vpop.permute.xlu0 %592
        %595 = vset.pattern.permute.xlu0 1
        %596 = vperm.xlu0 %595, %v471
        %v597 = vpop.permute.xlu0 %596
        %599 = vset.pattern.permute.xlu0 1
        %600 = vperm.xlu0 %599, %v472
        %v601 = vpop.permute.xlu0 %600
        %603 = vset.pattern.permute.xlu0 1
        %604 = vperm.xlu0 %603, %v473
        %v605 = vpop.permute.xlu0 %604
        %607 = vset.pattern.permute.xlu0 1
        %608 = vperm.xlu0 %607, %v474
        %v609 = vpop.permute.xlu0 %608
        %611 = vset.pattern.permute.xlu0 1
        %612 = vperm.xlu0 %611, %v475
        %v613 = vpop.permute.xlu0 %612
        %615 = vset.pattern.permute.xlu0 1
        %616 = vperm.xlu0 %615, %v476
        %v617 = vpop.permute.xlu0 %616
        %619 = vset.pattern.permute.xlu0 1
        %620 = vperm.xlu0 %619, %v477
        %v621 = vpop.permute.xlu0 %620
        %623 = vset.pattern.permute.xlu0 1
        %624 = vperm.xlu0 %623, %v478
        %v625 = vpop.permute.xlu0 %624
        %627 = vset.pattern.permute.xlu0 1
        %628 = vperm.xlu0 %627, %v479
        %v629 = vpop.permute.xlu0 %628
        %631 = vset.pattern.permute.xlu0 1
        %632 = vperm.xlu0 %631, %v480
        %v633 = vpop.permute.xlu0 %632
        %635 = vset.pattern.permute.xlu0 1
        %636 = vperm.xlu0 %635, %v481
        %v637 = vpop.permute.xlu0 %636
        %639 = vset.pattern.permute.xlu0 1
        %640 = vperm.xlu0 %639, %v482
        %v641 = vpop.permute.xlu0 %640
        %643 = vset.pattern.permute.xlu0 1
        %644 = vperm.xlu0 %643, %v483
        %v645 = vpop.permute.xlu0 %644
        %647 = vset.pattern.permute.xlu0 1
        %648 = vperm.xlu0 %647, %v484
        %v649 = vpop.permute.xlu0 %648
        %v651 = vlaneseq
        %v652 = vshrl.u32 %v651, 7
        %v653 = vsub.s32 1, %v652
        %v654 = vrot.slane %v486, %v653
        %v655 = vmul.f32 %v589, %v654
        %v656 = vmul.f32 %v593, %v654
        %v657 = vmul.f32 %v597, %v654
        %v658 = vmul.f32 %v601, %v654
        %v659 = vmul.f32 %v605, %v654
        %v660 = vmul.f32 %v609, %v654
        %v661 = vmul.f32 %v613, %v654
        %v662 = vmul.f32 %v617, %v654
        %v663 = vmul.f32 %v621, %v654
        %v664 = vmul.f32 %v625, %v654
        %v665 = vmul.f32 %v629, %v654
        %v666 = vmul.f32 %v633, %v654
        %v667 = vmul.f32 %v637, %v654
        %v668 = vmul.f32 %v641, %v654
        %v669 = vmul.f32 %v645, %v654
        %v670 = vmul.f32 %v649, %v654
        %v671 = vadd.f32 %v571, %v655
        %v672 = vadd.f32 %v572, %v656
        %v673 = vadd.f32 %v573, %v657
        %v674 = vadd.f32 %v574, %v658
        %v675 = vadd.f32 %v575, %v659
        %v676 = vadd.f32 %v576, %v660
        %v677 = vadd.f32 %v577, %v661
        %v678 = vadd.f32 %v578, %v662
        %v679 = vadd.f32 %v579, %v663
        %v680 = vadd.f32 %v580, %v664
        %v681 = vadd.f32 %v581, %v665
        %v682 = vadd.f32 %v582, %v666
        %v683 = vadd.f32 %v583, %v667
        %v684 = vadd.f32 %v584, %v668
        %v685 = vadd.f32 %v585, %v669
        %v686 = vadd.f32 %v586, %v670
        %687 = vset.pattern.permute.xlu0 2
        %688 = vperm.xlu0 %687, %v469
        %v689 = vpop.permute.xlu0 %688
        %691 = vset.pattern.permute.xlu0 2
        %692 = vperm.xlu0 %691, %v470
        %v693 = vpop.permute.xlu0 %692
        %695 = vset.pattern.permute.xlu0 2
        %696 = vperm.xlu0 %695, %v471
        %v697 = vpop.permute.xlu0 %696
        %699 = vset.pattern.permute.xlu0 2
        %700 = vperm.xlu0 %699, %v472
        %v701 = vpop.permute.xlu0 %700
        %703 = vset.pattern.permute.xlu0 2
        %704 = vperm.xlu0 %703, %v473
        %v705 = vpop.permute.xlu0 %704
        %707 = vset.pattern.permute.xlu0 2
        %708 = vperm.xlu0 %707, %v474
        %v709 = vpop.permute.xlu0 %708
        %711 = vset.pattern.permute.xlu0 2
        %712 = vperm.xlu0 %711, %v475
        %v713 = vpop.permute.xlu0 %712
        %715 = vset.pattern.permute.xlu0 2
        %716 = vperm.xlu0 %715, %v476
        %v717 = vpop.permute.xlu0 %716
        %719 = vset.pattern.permute.xlu0 2
        %720 = vperm.xlu0 %719, %v477
        %v721 = vpop.permute.xlu0 %720
        %723 = vset.pattern.permute.xlu0 2
        %724 = vperm.xlu0 %723, %v478
        %v725 = vpop.permute.xlu0 %724
        %727 = vset.pattern.permute.xlu0 2
        %728 = vperm.xlu0 %727, %v479
        %v729 = vpop.permute.xlu0 %728
        %731 = vset.pattern.permute.xlu0 2
        %732 = vperm.xlu0 %731, %v480
        %v733 = vpop.permute.xlu0 %732
        %735 = vset.pattern.permute.xlu0 2
        %736 = vperm.xlu0 %735, %v481
        %v737 = vpop.permute.xlu0 %736
        %739 = vset.pattern.permute.xlu0 2
        %740 = vperm.xlu0 %739, %v482
        %v741 = vpop.permute.xlu0 %740
        %743 = vset.pattern.permute.xlu0 2
        %744 = vperm.xlu0 %743, %v483
        %v745 = vpop.permute.xlu0 %744
        %747 = vset.pattern.permute.xlu0 2
        %748 = vperm.xlu0 %747, %v484
        %v749 = vpop.permute.xlu0 %748
        %v751 = vlaneseq
        %v752 = vshrl.u32 %v751, 7
        %v753 = vsub.s32 2, %v752
        %v754 = vrot.slane %v486, %v753
        %v755 = vmul.f32 %v689, %v754
        %v756 = vmul.f32 %v693, %v754
        %v757 = vmul.f32 %v697, %v754
        %v758 = vmul.f32 %v701, %v754
        %v759 = vmul.f32 %v705, %v754
        %v760 = vmul.f32 %v709, %v754
        %v761 = vmul.f32 %v713, %v754
        %v762 = vmul.f32 %v717, %v754
        %v763 = vmul.f32 %v721, %v754
        %v764 = vmul.f32 %v725, %v754
        %v765 = vmul.f32 %v729, %v754
        %v766 = vmul.f32 %v733, %v754
        %v767 = vmul.f32 %v737, %v754
        %v768 = vmul.f32 %v741, %v754
        %v769 = vmul.f32 %v745, %v754
        %v770 = vmul.f32 %v749, %v754
        %v771 = vadd.f32 %v671, %v755
        %v772 = vadd.f32 %v672, %v756
        %v773 = vadd.f32 %v673, %v757
        %v774 = vadd.f32 %v674, %v758
        %v775 = vadd.f32 %v675, %v759
        %v776 = vadd.f32 %v676, %v760
        %v777 = vadd.f32 %v677, %v761
        %v778 = vadd.f32 %v678, %v762
        %v779 = vadd.f32 %v679, %v763
        %v780 = vadd.f32 %v680, %v764
        %v781 = vadd.f32 %v681, %v765
        %v782 = vadd.f32 %v682, %v766
        %v783 = vadd.f32 %v683, %v767
        %v784 = vadd.f32 %v684, %v768
        %v785 = vadd.f32 %v685, %v769
        %v786 = vadd.f32 %v686, %v770
        %v787 = vld [vmem:[%s2] sm:$0x1]
        %v789 = vlaneseq
        %v790 = vshrl.u32 %v789, 7
        %v791 = vsub.s32 0, %v790
        %v792 = vrot.slane %v787, %v791
        %v794 = vadd.f32 %v771, %v792
        %v795 = vadd.f32 %v772, %v792
        %v796 = vadd.f32 %v773, %v792
        %v797 = vadd.f32 %v774, %v792
        %v798 = vadd.f32 %v775, %v792
        %v799 = vadd.f32 %v776, %v792
        %v800 = vadd.f32 %v777, %v792
        %v801 = vadd.f32 %v778, %v792
        %v802 = vadd.f32 %v779, %v792
        %v803 = vadd.f32 %v780, %v792
        %v804 = vadd.f32 %v781, %v792
        %v805 = vadd.f32 %v782, %v792
        %v806 = vadd.f32 %v783, %v792
        %v807 = vadd.f32 %v784, %v792
        %v808 = vadd.f32 %v785, %v792
        %v809 = vadd.f32 %v786, %v792
        %v810 = vmul.f32 %v794, 0.01
        %v811 = vmul.f32 %v795, 0.01
        %v812 = vmul.f32 %v796, 0.01
        %v813 = vmul.f32 %v797, 0.01
        %v814 = vmul.f32 %v798, 0.01
        %v815 = vmul.f32 %v799, 0.01
        %v816 = vmul.f32 %v800, 0.01
        %v817 = vmul.f32 %v801, 0.01
        %v818 = vmul.f32 %v802, 0.01
        %v819 = vmul.f32 %v803, 0.01
        %v820 = vmul.f32 %v804, 0.01
        %v821 = vmul.f32 %v805, 0.01
        %v822 = vmul.f32 %v806, 0.01
        %v823 = vmul.f32 %v807, 0.01
        %v824 = vmul.f32 %v808, 0.01
        %v825 = vmul.f32 %v809, 0.01
        %v826 = vmax.f32 %v794, %v810
        %v827 = vmax.f32 %v795, %v811
        %v828 = vmax.f32 %v796, %v812
        %v829 = vmax.f32 %v797, %v813
        %v830 = vmax.f32 %v798, %v814
        %v831 = vmax.f32 %v799, %v815
        %v832 = vmax.f32 %v800, %v816
        %v833 = vmax.f32 %v801, %v817
        %v834 = vmax.f32 %v802, %v818
        %v835 = vmax.f32 %v803, %v819
        %v836 = vmax.f32 %v804, %v820
        %v837 = vmax.f32 %v805, %v821
        %v838 = vmax.f32 %v806, %v822
        %v839 = vmax.f32 %v807, %v823
        %v840 = vmax.f32 %v808, %v824
        %v841 = vmax.f32 %v809, %v825
        %v842 = vpack.c.bf16 %v827, %v826
        %v843 = vpack.c.bf16 %v829, %v828
        %v844 = vpack.c.bf16 %v831, %v830
        %v845 = vpack.c.bf16 %v833, %v832
        %v846 = vpack.c.bf16 %v835, %v834
        %v847 = vpack.c.bf16 %v837, %v836
        %v848 = vpack.c.bf16 %v839, %v838
        %v849 = vpack.c.bf16 %v841, %v840
        %v850 = vld [vmem:[%s3] sm:$0xf]
        %v851 = vld [vmem:[%s3 + $0x4] sm:$0xf]
        %v852 = vld [vmem:[%s3 + $0x8] sm:$0xf]
        %v853 = vld [vmem:[%s3 + $0xc] sm:$0xf]
        %v854 = vld [vmem:[%s3 + $0x10] sm:$0xf]
        %v855 = vld [vmem:[%s3 + $0x14] sm:$0xf]
        %v856 = vld [vmem:[%s3 + $0x18] sm:$0xf]
        %v857 = vld [vmem:[%s3 + $0x1c] sm:$0xf]
        %v858 = vld [vmem:[%s3 + $0x20] sm:$0xf]
        %v859 = vld [vmem:[%s3 + $0x24] sm:$0xf]
        %v860 = vld [vmem:[%s3 + $0x28] sm:$0xf]
        %v861 = vld [vmem:[%s3 + $0x2c] sm:$0xf]
        %v862 = vld [vmem:[%s3 + $0x30] sm:$0xf]
        %v863 = vld [vmem:[%s3 + $0x34] sm:$0xf]
        %v864 = vld [vmem:[%s3 + $0x38] sm:$0xf]
        %v865 = vld [vmem:[%s3 + $0x3c] sm:$0xf]
        %v866 = vld [vmem:[%s4] sm:$0x1]
        %v868 = vlaneseq
        %v869 = vshrl.u32 %v868, 7
        %v870 = vsub.s32 0, %v869
        %v871 = vrot.slane %v866, %v870
        %v889 = vunpack.c.l.b16 %v850
        %v890 = vunpack.c.l.b16 %v851
        %v891 = vunpack.c.l.b16 %v852
        %v892 = vunpack.c.l.b16 %v853
        %v893 = vunpack.c.l.b16 %v854
        %v894 = vunpack.c.l.b16 %v855
        %v895 = vunpack.c.l.b16 %v856
        %v896 = vunpack.c.l.b16 %v857
        %v897 = vunpack.c.l.b16 %v858
        %v898 = vunpack.c.l.b16 %v859
        %v899 = vunpack.c.l.b16 %v860
        %v900 = vunpack.c.l.b16 %v861
        %v901 = vunpack.c.l.b16 %v862
        %v902 = vunpack.c.l.b16 %v863
        %v903 = vunpack.c.l.b16 %v864
        %v904 = vunpack.c.l.b16 %v865
        %v905 = vpack.c.b16 %v890, %v889
        %v906 = vpack.c.b16 %v892, %v891
        %v907 = vpack.c.b16 %v894, %v893
        %v908 = vpack.c.b16 %v896, %v895
        %v909 = vpack.c.b16 %v898, %v897
        %v910 = vpack.c.b16 %v900, %v899
        %v911 = vpack.c.b16 %v902, %v901
        %v912 = vpack.c.b16 %v904, %v903
        %921 = vmatprep.subr.bf16.mxu0 0
        %922 = vmatpush1.bf16.msra.mxu0 %v912
        %923 = vmatprep.subr.bf16.mxu0 0
        %924 = vmatpush1.bf16.msra.mxu0 %v911
        %925 = vmatprep.subr.bf16.mxu0 0
        %926 = vmatpush1.bf16.msra.mxu0 %v910
        %927 = vmatprep.subr.bf16.mxu0 0
        %928 = vmatpush1.bf16.msra.mxu0 %v909
        %929 = vmatprep.subr.bf16.mxu0 0
        %930 = vmatpush1.bf16.msra.mxu0 %v908
        %931 = vmatprep.subr.bf16.mxu0 0
        %932 = vmatpush1.bf16.msra.mxu0 %v907
        %933 = vmatprep.subr.bf16.mxu0 0
        %934 = vmatpush1.bf16.msra.mxu0 %v906
        %935 = vmatprep.subr.bf16.mxu0 0
        %936 = vmatpush1.bf16.msra.mxu0 %v905
        %937 = vmatprep.subr.bf16.mxu0 0
        %938 = vmatpush2.bf16.msra.mxu0 0
        %939 = vmatprep.subr.bf16.mxu0 0
        %940 = vmatpush2.bf16.msra.mxu0 0
        %941 = vmatprep.subr.bf16.mxu0 0
        %942 = vmatpush2.bf16.msra.mxu0 0
        %943 = vmatprep.subr.bf16.mxu0 0
        %944 = vmatpush2.bf16.msra.mxu0 0
        %945 = vmatprep.subr.bf16.mxu0 0
        %946 = vmatpush2.bf16.msra.mxu0 0
        %947 = vmatprep.subr.bf16.mxu0 0
        %948 = vmatpush2.bf16.msra.mxu0 0
        %949 = vmatprep.subr.bf16.mxu0 0
        %950 = vmatpush2.bf16.msra.mxu0 0
        %951 = vmatprep.subr.bf16.mxu0 0
        %952 = vmatpush2.bf16.msra.mxu0 0
        %953 = vmatprep.mubr.bf16.mxu0 0
        %954 = vmatmul.mubr.bf16.gmra.mxu0 %v842
        %v955 = vpop.f32.mrf.mxu0
        %v956 = vadd.f32 %v871, %v955
        %v957 = vpop.f32.mrf.mxu0
        %v958 = vpop.f32.mrf.mxu0
        %v959 = vadd.f32 %v871, %v958
        %v960 = vpop.f32.mrf.mxu0
        %961 = vmatprep.mubr.bf16.mxu0 0
        %962 = vmatmul.mubr.bf16.gmra.mxu0 %v843
        %v963 = vpop.f32.mrf.mxu0
        %v964 = vadd.f32 %v871, %v963
        %v965 = vpop.f32.mrf.mxu0
        %v966 = vpop.f32.mrf.mxu0
        %v967 = vadd.f32 %v871, %v966
        %v968 = vpop.f32.mrf.mxu0
        %969 = vmatprep.mubr.bf16.mxu0 0
        %970 = vmatmul.mubr.bf16.gmra.mxu0 %v844
        %v971 = vpop.f32.mrf.mxu0
        %v972 = vadd.f32 %v871, %v971
        %v973 = vpop.f32.mrf.mxu0
        %v974 = vpop.f32.mrf.mxu0
        %v975 = vadd.f32 %v871, %v974
        %v976 = vpop.f32.mrf.mxu0
        %977 = vmatprep.mubr.bf16.mxu0 0
        %978 = vmatmul.mubr.bf16.gmra.mxu0 %v845
        %v979 = vpop.f32.mrf.mxu0
        %v980 = vadd.f32 %v871, %v979
        %v981 = vpop.f32.mrf.mxu0
        %v982 = vpop.f32.mrf.mxu0
        %v983 = vadd.f32 %v871, %v982
        %v984 = vpop.f32.mrf.mxu0
        %985 = vmatprep.mubr.bf16.mxu0 0
        %986 = vmatmul.mubr.bf16.gmra.mxu0 %v846
        %v987 = vpop.f32.mrf.mxu0
        %v988 = vadd.f32 %v871, %v987
        %v989 = vpop.f32.mrf.mxu0
        %v990 = vpop.f32.mrf.mxu0
        %v991 = vadd.f32 %v871, %v990
        %v992 = vpop.f32.mrf.mxu0
        %993 = vmatprep.mubr.bf16.mxu0 0
        %994 = vmatmul.mubr.bf16.gmra.mxu0 %v847
        %v995 = vpop.f32.mrf.mxu0
        %v996 = vadd.f32 %v871, %v995
        %v997 = vpop.f32.mrf.mxu0
        %v998 = vpop.f32.mrf.mxu0
        %v999 = vadd.f32 %v871, %v998
        %v1000 = vpop.f32.mrf.mxu0
        %1001 = vmatprep.mubr.bf16.mxu0 0
        %1002 = vmatmul.mubr.bf16.gmra.mxu0 %v848
        %v1003 = vpop.f32.mrf.mxu0
        %v1004 = vadd.f32 %v871, %v1003
        %v1005 = vpop.f32.mrf.mxu0
        %v1006 = vpop.f32.mrf.mxu0
        %v1007 = vadd.f32 %v871, %v1006
        %v1008 = vpop.f32.mrf.mxu0
        %1009 = vmatprep.mubr.bf16.mxu0 0
        %1010 = vmatmul.mubr.bf16.gmra.mxu0 %v849
        %v1011 = vpop.f32.mrf.mxu0
        %v1012 = vadd.f32 %v871, %v1011
        %v1013 = vpop.f32.mrf.mxu0
        %v1014 = vpop.f32.mrf.mxu0
        %v1015 = vadd.f32 %v871, %v1014
        %v1016 = vpop.f32.mrf.mxu0
        %1017 = vdwg.mxu0
        %v1018 = vmax.f32 %v956, %v972
        %v1019 = vmax.f32 %v964, %v980
        %v1020 = vmax.f32 %v1018, %v988
        %v1021 = vmax.f32 %v1019, %v996
        %v1022 = vmax.f32 %v1020, %v1004
        %v1023 = vmax.f32 %v1021, %v1012
        %v1024 = vmax.f32 %v1022, %v1023
        %v1025 = vmax.f32 %v959, %v975
        %v1026 = vmax.f32 %v967, %v983
        %v1027 = vmax.f32 %v1025, %v991
        %v1028 = vmax.f32 %v1026, %v999
        %v1029 = vmax.f32 %v1027, %v1007
        %v1030 = vmax.f32 %v1028, %v1015
        %v1031 = vmax.f32 %v1029, %v1030
        %v1032 = vmul.f32 %v1024, 0.01
        %v1033 = vmul.f32 %v1031, 0.01
        %v1034 = vmax.f32 %v1024, %v1032
        %v1035 = vmax.f32 %v1031, %v1033
        %v1036 = vpack.c.bf16 %v1035, %v1034
        %v1037 = vld [vmem:[%s5] sm:$0xf]
        %v1038 = vld [vmem:[%s5 + $0x4] sm:$0xf]
        %v1039 = vld [vmem:[%s5 + $0x8] sm:$0xf]
        %v1040 = vld [vmem:[%s5 + $0xc] sm:$0xf]
        %v1041 = vld [vmem:[%s5 + $0x10] sm:$0xf]
        %v1042 = vld [vmem:[%s5 + $0x14] sm:$0xf]
        %v1043 = vld [vmem:[%s5 + $0x18] sm:$0xf]
        %v1044 = vld [vmem:[%s5 + $0x1c] sm:$0xf]
        %v1045 = vld [vmem:[%s5 + $0x20] sm:$0xf]
        %v1046 = vld [vmem:[%s5 + $0x24] sm:$0xf]
        %v1047 = vld [vmem:[%s5 + $0x28] sm:$0xf]
        %v1048 = vld [vmem:[%s5 + $0x2c] sm:$0xf]
        %v1049 = vld [vmem:[%s5 + $0x30] sm:$0xf]
        %v1050 = vld [vmem:[%s5 + $0x34] sm:$0xf]
        %v1051 = vld [vmem:[%s5 + $0x38] sm:$0xf]
        %v1052 = vld [vmem:[%s5 + $0x3c] sm:$0xf]
        %v1053 = vld [vmem:[%s6] sm:$0x1]
        %v1055 = vlaneseq
        %v1056 = vshrl.u32 %v1055, 7
        %v1057 = vsub.s32 0, %v1056
        %v1058 = vrot.slane %v1053, %v1057
        %v1076 = vunpack.c.l.b16 %v1037
        %v1077 = vunpack.c.l.b16 %v1038
        %v1078 = vunpack.c.l.b16 %v1039
        %v1079 = vunpack.c.l.b16 %v1040
        %v1080 = vunpack.c.l.b16 %v1041
        %v1081 = vunpack.c.l.b16 %v1042
        %v1082 = vunpack.c.l.b16 %v1043
        %v1083 = vunpack.c.l.b16 %v1044
        %v1084 = vunpack.c.l.b16 %v1045
        %v1085 = vunpack.c.l.b16 %v1046
        %v1086 = vunpack.c.l.b16 %v1047
        %v1087 = vunpack.c.l.b16 %v1048
        %v1088 = vunpack.c.l.b16 %v1049
        %v1089 = vunpack.c.l.b16 %v1050
        %v1090 = vunpack.c.l.b16 %v1051
        %v1091 = vunpack.c.l.b16 %v1052
        %v1092 = vpack.c.b16 %v1077, %v1076
        %v1093 = vpack.c.b16 %v1079, %v1078
        %v1094 = vpack.c.b16 %v1081, %v1080
        %v1095 = vpack.c.b16 %v1083, %v1082
        %v1096 = vpack.c.b16 %v1085, %v1084
        %v1097 = vpack.c.b16 %v1087, %v1086
        %v1098 = vpack.c.b16 %v1089, %v1088
        %v1099 = vpack.c.b16 %v1091, %v1090
        %1108 = vmatprep.subr.bf16.mxu0 0
        %1109 = vmatpush1.bf16.msra.mxu0 %v1099
        %1110 = vmatprep.subr.bf16.mxu0 0
        %1111 = vmatpush1.bf16.msra.mxu0 %v1098
        %1112 = vmatprep.subr.bf16.mxu0 0
        %1113 = vmatpush1.bf16.msra.mxu0 %v1097
        %1114 = vmatprep.subr.bf16.mxu0 0
        %1115 = vmatpush1.bf16.msra.mxu0 %v1096
        %1116 = vmatprep.subr.bf16.mxu0 0
        %1117 = vmatpush1.bf16.msra.mxu0 %v1095
        %1118 = vmatprep.subr.bf16.mxu0 0
        %1119 = vmatpush1.bf16.msra.mxu0 %v1094
        %1120 = vmatprep.subr.bf16.mxu0 0
        %1121 = vmatpush1.bf16.msra.mxu0 %v1093
        %1122 = vmatprep.subr.bf16.mxu0 0
        %1123 = vmatpush1.bf16.msra.mxu0 %v1092
        %1124 = vmatprep.subr.bf16.mxu0 0
        %1125 = vmatpush2.bf16.msra.mxu0 0
        %1126 = vmatprep.subr.bf16.mxu0 0
        %1127 = vmatpush2.bf16.msra.mxu0 0
        %1128 = vmatprep.subr.bf16.mxu0 0
        %1129 = vmatpush2.bf16.msra.mxu0 0
        %1130 = vmatprep.subr.bf16.mxu0 0
        %1131 = vmatpush2.bf16.msra.mxu0 0
        %1132 = vmatprep.subr.bf16.mxu0 0
        %1133 = vmatpush2.bf16.msra.mxu0 0
        %1134 = vmatprep.subr.bf16.mxu0 0
        %1135 = vmatpush2.bf16.msra.mxu0 0
        %1136 = vmatprep.subr.bf16.mxu0 0
        %1137 = vmatpush2.bf16.msra.mxu0 0
        %1138 = vmatprep.subr.bf16.mxu0 0
        %1139 = vmatpush2.bf16.msra.mxu0 0
        %1140 = vmatprep.mubr.bf16.mxu0 0
        %1141 = vmatmul.mubr.bf16.gmra.mxu0 %v1036
        %v1142 = vpop.f32.mrf.mxu0
        %v1143 = vadd.f32 %v1058, %v1142
        %v1144 = vpop.f32.mrf.mxu0
        %v1145 = vpop.f32.mrf.mxu0
        %v1146 = vadd.f32 %v1058, %v1145
        %v1147 = vpop.f32.mrf.mxu0
        %1148 = vdwg.mxu0
        %v1149 = vmul.f32 %v1143, 0.01
        %v1150 = vmul.f32 %v1146, 0.01
        %v1151 = vmax.f32 %v1143, %v1149
        %v1152 = vmax.f32 %v1146, %v1150
        %v1153 = vpack.c.bf16 %v1152, %v1151
        %v1154 = vld [vmem:[#allocation3] sm:$0xf]
        %v1155 = vld [vmem:[#allocation3 + $0x4] sm:$0xf]
        %v1156 = vld [vmem:[#allocation3 + $0x8] sm:$0xf]
        %v1157 = vld [vmem:[#allocation3 + $0xc] sm:$0xf]
        %v1158 = vld [vmem:[#allocation3 + $0x10] sm:$0xf]
        %v1159 = vld [vmem:[#allocation3 + $0x14] sm:$0xf]
        %v1160 = vld [vmem:[#allocation3 + $0x18] sm:$0xf]
        %v1161 = vld [vmem:[#allocation3 + $0x1c] sm:$0xf]
        %v1162 = vld [vmem:[#allocation3 + $0x20] sm:$0xf]
        %v1163 = vld [vmem:[#allocation3 + $0x24] sm:$0xf]
        %v1164 = vld [vmem:[#allocation3 + $0x28] sm:$0xf]
        %v1165 = vld [vmem:[#allocation3 + $0x2c] sm:$0xf]
        %v1166 = vld [vmem:[#allocation3 + $0x30] sm:$0xf]
        %v1167 = vld [vmem:[#allocation3 + $0x34] sm:$0xf]
        %v1168 = vld [vmem:[#allocation3 + $0x38] sm:$0xf]
        %v1169 = vld [vmem:[#allocation3 + $0x3c] sm:$0xf]
        %v1170 = vld [vmem:[%s8] sm:$0x1]
        %v1172 = vlaneseq
        %v1173 = vshrl.u32 %v1172, 7
        %v1174 = vsub.s32 0, %v1173
        %v1175 = vrot.slane %v1170, %v1174
        %v1193 = vunpack.c.l.b16 %v1154
        %v1194 = vunpack.c.l.b16 %v1155
        %v1195 = vunpack.c.l.b16 %v1156
        %v1196 = vunpack.c.l.b16 %v1157
        %v1197 = vunpack.c.l.b16 %v1158
        %v1198 = vunpack.c.l.b16 %v1159
        %v1199 = vunpack.c.l.b16 %v1160
        %v1200 = vunpack.c.l.b16 %v1161
        %v1201 = vunpack.c.l.b16 %v1162
        %v1202 = vunpack.c.l.b16 %v1163
        %v1203 = vunpack.c.l.b16 %v1164
        %v1204 = vunpack.c.l.b16 %v1165
        %v1205 = vunpack.c.l.b16 %v1166
        %v1206 = vunpack.c.l.b16 %v1167
        %v1207 = vunpack.c.l.b16 %v1168
        %v1208 = vunpack.c.l.b16 %v1169
        %v1209 = vpack.c.b16 %v1194, %v1193
        %v1210 = vpack.c.b16 %v1196, %v1195
        %v1211 = vpack.c.b16 %v1198, %v1197
        %v1212 = vpack.c.b16 %v1200, %v1199
        %v1213 = vpack.c.b16 %v1202, %v1201
        %v1214 = vpack.c.b16 %v1204, %v1203
        %v1215 = vpack.c.b16 %v1206, %v1205
        %v1216 = vpack.c.b16 %v1208, %v1207
        %1225 = vmatprep.subr.bf16.mxu0 0
        %1226 = vmatpush1.bf16.msra.mxu0 %v1216
        %1227 = vmatprep.subr.bf16.mxu0 0
        %1228 = vmatpush1.bf16.msra.mxu0 %v1215
        %1229 = vmatprep.subr.bf16.mxu0 0
        %1230 = vmatpush1.bf16.msra.mxu0 %v1214
        %1231 = vmatprep.subr.bf16.mxu0 0
        %1232 = vmatpush1.bf16.msra.mxu0 %v1213
        %1233 = vmatprep.subr.bf16.mxu0 0
        %1234 = vmatpush1.bf16.msra.mxu0 %v1212
        %1235 = vmatprep.subr.bf16.mxu0 0
        %1236 = vmatpush1.bf16.msra.mxu0 %v1211
        %1237 = vmatprep.subr.bf16.mxu0 0
        %1238 = vmatpush1.bf16.msra.mxu0 %v1210
        %1239 = vmatprep.subr.bf16.mxu0 0
        %1240 = vmatpush1.bf16.msra.mxu0 %v1209
        %1241 = vmatprep.subr.bf16.mxu0 0
        %1242 = vmatpush2.bf16.msra.mxu0 0
        %1243 = vmatprep.subr.bf16.mxu0 0
        %1244 = vmatpush2.bf16.msra.mxu0 0
        %1245 = vmatprep.subr.bf16.mxu0 0
        %1246 = vmatpush2.bf16.msra.mxu0 0
        %1247 = vmatprep.subr.bf16.mxu0 0
        %1248 = vmatpush2.bf16.msra.mxu0 0
        %1249 = vmatprep.subr.bf16.mxu0 0
        %1250 = vmatpush2.bf16.msra.mxu0 0
        %1251 = vmatprep.subr.bf16.mxu0 0
        %1252 = vmatpush2.bf16.msra.mxu0 0
        %1253 = vmatprep.subr.bf16.mxu0 0
        %1254 = vmatpush2.bf16.msra.mxu0 0
        %1255 = vmatprep.subr.bf16.mxu0 0
        %1256 = vmatpush2.bf16.msra.mxu0 0
        %1257 = vmatprep.mubr.bf16.mxu0 0
        %1258 = vmatmul.mubr.bf16.gmra.mxu0 %v1153
        %v1259 = vpop.f32.mrf.mxu0
        %v1260 = vadd.f32 %v1175, %v1259
        %v1261 = vpop.f32.mrf.mxu0
        %v1262 = vpop.f32.mrf.mxu0
        %v1263 = vadd.f32 %v1175, %v1262
        %v1264 = vpop.f32.mrf.mxu0
        %1265 = vdwg.mxu0
        %v1266 = vadd.f32 %v1260, %v1034
        %v1267 = vadd.f32 %v1263, %v1035
        %v1268 = vmul.f32 %v1266, 0.01
        %v1269 = vmul.f32 %v1267, 0.01
        %v1270 = vmax.f32 %v1266, %v1268
        %v1271 = vmax.f32 %v1267, %v1269
        %v1272 = vpack.c.bf16 %v1271, %v1270
        %v1274 = vunpack.c.l.b16 %v1272
        %v1275 = vunpack.c.h.b16 %v1272
        %v1276 = vpack.c.b16 %v1274, %v1274
        %v1277 = vpack.c.b16 %v1275, %v1275
        %1280 = vst [vmem:[%s449] sm:$0xf] %v1276
        %1281 = vst [vmem:[%s449 + $0x4] sm:$0xf] %v1277
        %s1282 = sand.u32 %s226, 1
        %s1283 = scalar_lea.sflag [#allocation5], %s1282
        %s1284 = sand.u32 %s226, 1
        %s1285 = smul.addr %s1284, 8
        %s1286 = scalar_lea.vmem [#allocation6], %s1285
        // Predicated region
        $region102: #{tpu_custom_call.1} parent=92 // pred_check
          %p1287 = pneg %p236
        $region103: #{tpu_custom_call.1} parent=92 // pred_check_branch
          %1289 = sbr.rel (%p1287) target = $region105
        $region104: #{tpu_custom_call.1} parent=92 // pred_region
          %s1290 = smul.u32 2, %s24
          %s1292 = ssub.s32 128, 128
          %1293 = vsyncadd %s1283, %s1292
          %s1294 = smul.addr %s1290, 64
          %s1295 = scalar_lea.hbm %s9, %s1294
          %s1296 = sshll.u32 %s1286, 4
          %s1297 = int_to_ptr.vmem [resolvable:$true] %s1296
          %1302 = dma.vmem_to_hbm [thread:$0]  %s1297, 128, %s1295, %s1283, 64, 64, 4
        $region105: #{tpu_custom_call.1} parent=92 // pred_fallthru
          _
      $region93: #{tpu_custom_call.1} parent=5 // pred_fallthru
        _
      %p1303 = scmp.le.s32.totalorder 2, %s19
      // Predicated region
      $region106: #{tpu_custom_call.1} parent=5 // pred_check
        %p1304 = pneg %p1303
      $region107: #{tpu_custom_call.1} parent=5 // pred_check_branch
        %1306 = sbr.rel (%p1304) target = $region109
      $region108: #{tpu_custom_call.1} parent=5 // pred_region
        %s1307 = ssub.s32 %s19, 2
        // Predicated region
        $region110: #{tpu_custom_call.1} parent=108 // pred_check
          %p1308 = pneg %p242
        $region111: #{tpu_custom_call.1} parent=108 // pred_check_branch
          %1310 = sbr.rel (%p1308) target = $region113
        $region112: #{tpu_custom_call.1} parent=108 // pred_region
          %s1311 = sand.u32 %s227, 1
          %s1312 = scalar_lea.sflag [#allocation5], %s1311
          %s1313 = sand.u32 %s227, 1
          %s1314 = smul.addr %s1313, 8
          %s1315 = scalar_lea.vmem [#allocation6], %s1314
          %1316 = dma.done %s1312, 128
        $region113: #{tpu_custom_call.1} parent=108 // pred_fallthru
          _
      $region109: #{tpu_custom_call.1} parent=5 // pred_fallthru
        _
    $region6: #{tpu_custom_call.1} parent=1 // loop_footer
      %s23 = sadd.s32 1, %s19
    $region7: #{tpu_custom_call.1} parent=1 // loop_footer_branch
      %18 = sbr.rel target = $region3
    $region8: #{tpu_custom_call.1} parent=1 // loop_exit
      _
    %1317 = vsyncpa [#allocation4], 1
    %s1318 = scalar_lea.sflag [#allocation4], 1
    %1319 = vsyncpa %s1318, 1
    %1320 = vsyncpa [#allocation5], 1
    %s1321 = scalar_lea.sflag [#allocation5], 1
    %1322 = vsyncpa %s1321, 1

</llo_original>
